<compile_context>
chip_gen: v6e
topology: v6e:2x2x1
jax: 0.10.0
libtpu: 0.0.40
codegen_flags: <defaults>
</compile_context>

<pallas_src>
import functools

import numpy as np
import jax
import jax.numpy as jnp
from jax import lax
from jax.experimental import pallas as pl
from jax.experimental.pallas import tpu as pltpu


_VMEM_LIMIT = 40 * 1024 * 1024   # > scoped defaults (16/32 MiB), < v7x 64 MiB
_ROW_CAP = 2048                  # target rows per conv tile


def _round_up(x, m):
    return (x + m - 1) // m * m


# ----------------------------------------------------------------------------
# Pallas kernels
# ----------------------------------------------------------------------------
def _matmul_affine_kernel(x_ref, w_ref, scale_ref, shift_ref, o_ref, *,
                          apply_relu):
    """o = act((x @ w) * scale + shift); bf16 operands, f32 MXU accumulation."""
    y = jnp.dot(x_ref[...], w_ref[...], preferred_element_type=jnp.float32)
    y = y * scale_ref[...] + shift_ref[...]
    if apply_relu:
        y = jnp.maximum(y, 0.0)
    o_ref[...] = y.astype(o_ref.dtype)


def _tapconv_kernel(x_ref, w_ref, scale_ref, shift_ref, o_ref, *,
                    t_out, tpp, hpp, wpp, hs, w_out, taps, apply_relu):
    """Row-shift tap conv + BN affine + ReLU, no im2col in HBM.

    x_ref is the whole zero-padded activation flattened to (rows, Cin) and
    held VMEM-resident (constant index_map).  Each grid step computes one
    (frame, h-slab) output tile: the kw taps are folded into K by an in-VMEM
    channel concat (K = kw*Cin), leaving kt*kh row-shifted matmuls whose row
    offsets are all multiples of 8 (wpp % 8 == 0).
    """
    kt, kh, kw = taps
    i = pl.program_id(0)                 # one (sample, output frame)
    j = pl.program_id(1)                 # one h slab
    n_idx = i // t_out
    t0 = i - n_idx * t_out
    hpwp = hpp * wpp
    rows = hs * wpp
    q0 = ((n_idx * tpp + t0) * hpp + j * hs) * wpp
    q0 = pl.multiple_of(q0, 8)
    cout = o_ref.shape[-1]
    acc = jnp.zeros((rows, cout), jnp.float32)
    for dt in range(kt):
        for dh in range(kh):
            g = dt * kh + dh
            s0 = pl.multiple_of(q0 + dt * hpwp + dh * wpp, 8)
            xs = jnp.concatenate(
                [x_ref[pl.ds(s0 + dw, rows), :] for dw in range(kw)], axis=-1)
            acc = acc + jnp.dot(xs, w_ref[g],
                                preferred_element_type=jnp.float32)
    y = acc * scale_ref[...] + shift_ref[...]
    if apply_relu:
        y = jnp.maximum(y, 0.0)
    # Drop the (zero-padded / alignment) waste columns and write the tile
    # straight into its final (n*t, h, w, cout) slot -- no epilogue pass.
    y = y.reshape(hs, wpp, cout)[:, :w_out, :]
    o_ref[0] = y.astype(o_ref.dtype)


# ----------------------------------------------------------------------------
# Fused Unit3D (1x1x1): matmul + BN affine + ReLU
# ----------------------------------------------------------------------------
def _row_tile(m):
    """Largest multiple-of-8 divisor of m that is <= 1024 (0 if none)."""
    best = 0
    for d in range(8, min(m, 1024) + 1, 8):
        if m % d == 0:
            best = d
    return best


def fused_matmul(x2d, w, scale, shift, *, apply_relu, out_dtype):
    """act((x2d @ w) * scale + shift) on the MXU; K and N stay whole."""
    m, k = x2d.shape
    n = w.shape[1]
    scale2 = scale.reshape(1, n).astype(jnp.float32)
    shift2 = shift.reshape(1, n).astype(jnp.float32)
    kern = functools.partial(_matmul_affine_kernel, apply_relu=apply_relu)

    if m <= 1024:
        # Small problems: single step (whole operands in VMEM).
        return pl.pallas_call(
            kern, out_shape=jax.ShapeDtypeStruct((m, n), out_dtype),
            compiler_params=pltpu.CompilerParams(
                vmem_limit_bytes=_VMEM_LIMIT),
        )(x2d, w, scale2, shift2)

    tm = _row_tile(m)
    mp = m
    if tm < 256:                       # no good divisor: pad rows, slice after
        tm = 512
        mp = _round_up(m, tm)
        x2d = jnp.pad(x2d, ((0, mp - m), (0, 0)))

    out = pl.pallas_call(
        kern,
        out_shape=jax.ShapeDtypeStruct((mp, n), out_dtype),
        grid=(mp // tm,),
        in_specs=[
            pl.BlockSpec((tm, k), lambda i: (i, 0)),
            pl.BlockSpec((k, n), lambda i: (0, 0)),
            pl.BlockSpec((1, n), lambda i: (0, 0)),
            pl.BlockSpec((1, n), lambda i: (0, 0)),
        ],
        out_specs=pl.BlockSpec((tm, n), lambda i: (i, 0)),
        compiler_params=pltpu.CompilerParams(
            dimension_semantics=("parallel",),
            vmem_limit_bytes=_VMEM_LIMIT),
    )(x2d, w, scale2, shift2)
    return out[:m] if mp != m else out


def conv1x1(x, prm, apply_relu=True, out_dtype=jnp.bfloat16):
    w, s, b = prm
    n, t, h, wd, c = x.shape
    y = fused_matmul(x.reshape(n * t * h * wd, c), w, s, b,
                     apply_relu=apply_relu, out_dtype=out_dtype)
    return y.reshape(n, t, h, wd, w.shape[1])


# ----------------------------------------------------------------------------
# Row-shift tap convolution (3x3x3 stride-1, and the space-to-depth stem)
# ----------------------------------------------------------------------------
def _pick_hs(h_out, wpp, row_cap=_ROW_CAP):
    best = 1
    for d in range(1, h_out + 1):
        if h_out % d == 0 and d * wpp <= row_cap:
            best = d
    return best


def _with_guard(n, t_out, tpp, hpp, wpp, taps, hs, h_out):
    """Grow the trailing t-padding until no slice can read past the array."""
    kt, kh, kw = taps
    while True:
        total = n * tpp * hpp * wpp
        q0_max = ((n - 1) * tpp + t_out - 1) * hpp * wpp + (h_out - hs) * wpp
        mx = (q0_max + hs * wpp - 1 +
              (kt - 1) * hpp * wpp + (kh - 1) * wpp + (kw - 1))
        if mx < total:
            return tpp
        tpp += 1


def tap_conv(x, w_fold, scale, shift, *, taps, lpad, rpad, apply_relu=True,
             out_dtype=jnp.bfloat16):
    """Stride-1 KTxKHxKW conv + BN affine (+ReLU) as one tiled Pallas kernel.

    x:       (n, t, h, w, cin) channels-last activation (output dims == t,h,w).
    w_fold:  (KT*KH, KW*cin, cout), kw taps folded into K.
    lpad/rpad: the conv's required zero padding per (t, h, w) dim.
    """
    n, t, h, w, c = x.shape
    cout = w_fold.shape[-1]
    wpp = _round_up(w + lpad[2] + rpad[2], 8)       # 8-aligned row stride
    hpp = h + lpad[1] + rpad[1]
    tpp0 = t + lpad[0] + rpad[0]
    hs = _pick_hs(h, wpp)
    tpp = _with_guard(n, t, tpp0, hpp, wpp, taps, hs, h)
    xp = jnp.pad(x, ((0, 0),
                     (lpad[0], tpp - t - lpad[0]),
                     (lpad[1], hpp - h - lpad[1]),
                     (lpad[2], wpp - w - lpad[2]),
                     (0, 0)))
    x2 = xp.reshape(n * tpp * hpp * wpp, c)          # free (leading-dim) reshape
    rows_total = x2.shape[0]
    kern = functools.partial(
        _tapconv_kernel, t_out=t, tpp=tpp, hpp=hpp, wpp=wpp, hs=hs, w_out=w,
        taps=taps, apply_relu=apply_relu)
    out = pl.pallas_call(
        kern,
        out_shape=jax.ShapeDtypeStruct((n * t, h, w, cout), out_dtype),
        grid=(n * t, h // hs),
        in_specs=[
            pl.BlockSpec((rows_total, c), lambda i, j: (0, 0)),   # resident
            pl.BlockSpec(w_fold.shape, lambda i, j: (0, 0, 0)),   # resident
            pl.BlockSpec((1, cout), lambda i, j: (0, 0)),
            pl.BlockSpec((1, cout), lambda i, j: (0, 0)),
        ],
        out_specs=pl.BlockSpec((1, hs, w, cout), lambda i, j: (i, j, 0, 0)),
        compiler_params=pltpu.CompilerParams(
            dimension_semantics=("parallel", "parallel"),
            vmem_limit_bytes=_VMEM_LIMIT),
    )(x2, w_fold,
      scale.reshape(1, cout).astype(jnp.float32),
      shift.reshape(1, cout).astype(jnp.float32))
    return out.reshape(n, t, h, w, cout)


def conv3x3_same(x, w9, scale, shift, *, apply_relu=True,
                 out_dtype=jnp.bfloat16):
    return tap_conv(x, w9, scale, shift, taps=(3, 3, 3),
                    lpad=(1, 1, 1), rpad=(1, 1, 1),
                    apply_relu=apply_relu, out_dtype=out_dtype)


def _space_to_depth2(x):
    n, t, h, w, c = x.shape
    x = x.reshape(n, t // 2, 2, h // 2, 2, w // 2, 2, c)
    x = jnp.transpose(x, (0, 1, 3, 5, 2, 4, 6, 7))
    return x.reshape(n, t // 2, h // 2, w // 2, 8 * c)


def stem_conv7x7s2(x, w16, scale, shift, *, apply_relu=True,
                   out_dtype=jnp.bfloat16):
    """Conv3d_1a_7x7 (stride 2, 'same') + BN + ReLU without an HBM im2col.

    A (2,2,2) space-to-depth turns the stride-2 7x7x7 conv into a stride-1
    4x4x4 tap conv over 8*Cin=24 packed channels; the 'same' pads (2,3) per
    dim become packed pads (1,2).  The 343x patch expansion stays in VMEM.
    """
    n, t, h, w, c = x.shape
    # TODO(synk): odd T/H/W would need an extra zero pre-pad; InceptionI3d
    # inputs (224x224 and even frame counts) are always even.
    assert t % 2 == 0 and h % 2 == 0 and w % 2 == 0
    xp = _space_to_depth2(x)
    return tap_conv(xp, w16, scale, shift, taps=(4, 4, 4),
                    lpad=(1, 1, 1), rpad=(2, 2, 2),
                    apply_relu=apply_relu, out_dtype=out_dtype)


# ----------------------------------------------------------------------------
# Pooling (kept as XLA reduce_window; memory-bound, no matmul FLOPs)
# ----------------------------------------------------------------------------
def _same_pad(size, k, s):
    """Matches pytorch-i3d Unit3D / MaxPool3dSamePadding.compute_pad."""
    if size % s == 0:
        pad = max(k - s, 0)
    else:
        pad = max(k - (size % s), 0)
    return pad // 2, pad - pad // 2


def maxpool3d_same(x, kernel, stride):
    n, t, h, w, c = x.shape
    pt = _same_pad(t, kernel[0], stride[0])
    ph = _same_pad(h, kernel[1], stride[1])
    pw = _same_pad(w, kernel[2], stride[2])
    xp = jnp.pad(x, ((0, 0), pt, ph, pw, (0, 0)))   # zero pad, like F.pad
    return lax.reduce_window(
        xp, jnp.asarray(-jnp.inf, xp.dtype), lax.max,
        window_dimensions=(1,) + tuple(kernel) + (1,),
        window_strides=(1,) + tuple(stride) + (1,),
        padding="VALID")


def avgpool3d_valid(x, kernel):
    n, t, h, w, c = x.shape
    # TODO(synk): AvgPool3d([2,7,7]) assumes 224x224 inputs (7x7 spatial at
    # this depth); the window is clamped so smaller test inputs are accepted.
    kt, kh, kw = min(kernel[0], t), min(kernel[1], h), min(kernel[2], w)
    s = lax.reduce_window(
        x.astype(jnp.float32), jnp.asarray(0.0, jnp.float32), lax.add,
        window_dimensions=(1, kt, kh, kw, 1),
        window_strides=(1, 1, 1, 1, 1),
        padding="VALID")
    return s / float(kt * kh * kw)


# ----------------------------------------------------------------------------
# Inception module
# ----------------------------------------------------------------------------
INCEPTION_CFG = {
    "Mixed_3b": (192, (64, 96, 128, 16, 32, 32)),
    "Mixed_3c": (256, (128, 128, 192, 32, 96, 64)),
    "Mixed_4b": (480, (192, 96, 208, 16, 48, 64)),
    "Mixed_4c": (512, (160, 112, 224, 24, 64, 64)),
    "Mixed_4d": (512, (128, 128, 256, 24, 64, 64)),
    "Mixed_4e": (512, (112, 144, 288, 32, 64, 64)),
    "Mixed_4f": (528, (256, 160, 320, 32, 128, 128)),
    "Mixed_5b": (832, (256, 160, 320, 32, 128, 128)),
    "Mixed_5c": (832, (384, 192, 384, 48, 128, 128)),
}


def inception_apply(x, p, cfg):
    o0, o1a, o1b, o2a, o2b, o3 = cfg
    n, t, h, w, c = x.shape
    # b0 / b1a / b2a share the same input: ONE fused matmul over the
    # channel-concatenated weights, split on the channel axis after.
    y = fused_matmul(x.reshape(n * t * h * w, c), *p["fused1x1"],
                     apply_relu=True, out_dtype=jnp.bfloat16)
    b0 = y[:, :o0].reshape(n, t, h, w, o0)
    b1a = y[:, o0:o0 + o1a].reshape(n, t, h, w, o1a)
    b2a = y[:, o0 + o1a:].reshape(n, t, h, w, o2a)
    b1 = conv3x3_same(b1a, *p["b1b"])
    b2 = conv3x3_same(b2a, *p["b2b"])
    b3 = conv1x1(maxpool3d_same(x, (3, 3, 3), (1, 1, 1)), p["b3b"])
    # TODO(synk): writing each branch straight into its channel slice of one
    # preallocated tensor would save this concat's extra HBM pass.
    return jnp.concatenate([b0, b1, b2, b3], axis=-1)


# ----------------------------------------------------------------------------
# Parameters (deterministic synthetic init, shapes from InceptionI3d.__init__)
# ----------------------------------------------------------------------------
def _fold_taps(w_t):
    """Torch (Cout, Cin, KT, KH, KW) -> kernel layout (KT*KH, KW*Cin, Cout)."""
    co, ci, kt, kh, kw = w_t.shape
    a = np.transpose(w_t, (2, 3, 4, 1, 0))
    return np.ascontiguousarray(a.reshape(kt * kh, kw * ci, co))


def _pack_stem_weight(w_t):
    """Torch (Cout, 3, 7, 7, 7) -> space-to-depth folded (16, 4*24, Cout)."""
    co, ci, k, _, _ = w_t.shape
    assert k == 7
    kp = 4
    wpk = np.zeros((co, 2, 2, 2, ci, kp, kp, kp), np.float32)
    for at in range(kp):
        for ah in range(kp):
            for aw in range(kp):
                for pt in range(2):
                    for ph in range(2):
                        for pw in range(2):
                            kt, kh, kw = 2 * at + pt, 2 * ah + ph, 2 * aw + pw
                            if kt < k and kh < k and kw < k:
                                wpk[:, pt, ph, pw, :, at, ah, aw] = \
                                    w_t[:, :, kt, kh, kw]
    wpk = wpk.reshape(co, 8 * ci, kp, kp, kp)
    return _fold_taps(wpk)


def build_params():
    rng = np.random.RandomState(42)

    def bn_affine(cout):       # eval-mode BN folded: eps=1e-3, mean=0, var=1
        gamma = np.ones(cout, np.float32)
        beta = np.zeros(cout, np.float32)
        mean = np.zeros(cout, np.float32)
        var = np.ones(cout, np.float32)
        scale = gamma / np.sqrt(var + 1e-3)
        shift = beta - mean * scale
        return scale, shift

    def dev(w, s, b):
        return (jnp.asarray(w, jnp.bfloat16), jnp.asarray(s, jnp.float32),
                jnp.asarray(b, jnp.float32))

    def unit1x1(cin, cout):
        w = (rng.standard_normal((cout, cin)) *
             np.sqrt(2.0 / cin)).astype(np.float32)
        s, b = bn_affine(cout)
        return np.ascontiguousarray(w.T), s, b          # (cin, cout)

    def unit3x3(cin, cout):
        fan = cin * 27
        w = (rng.standard_normal((cout, cin, 3, 3, 3)) *
             np.sqrt(2.0 / fan)).astype(np.float32)
        s, b = bn_affine(cout)
        return _fold_taps(w), s, b

    P = {}
    fan = 3 * 343
    w1 = (rng.standard_normal((64, 3, 7, 7, 7)) *
          np.sqrt(2.0 / fan)).astype(np.float32)
    s1, b1 = bn_affine(64)
    P["Conv3d_1a_7x7"] = dev(_pack_stem_weight(w1), s1, b1)

    P["Conv3d_2b_1x1"] = dev(*unit1x1(64, 64))
    P["Conv3d_2c_3x3"] = dev(*unit3x3(64, 192))

    for name, (cin, (o0, o1a, o1b, o2a, o2b, o3)) in INCEPTION_CFG.items():
        u0, u1a, u2a = unit1x1(cin, o0), unit1x1(cin, o1a), unit1x1(cin, o2a)
        w_cat = np.concatenate([u0[0], u1a[0], u2a[0]], axis=1)
        s_cat = np.concatenate([u0[1], u1a[1], u2a[1]])
        t_cat = np.concatenate([u0[2], u1a[2], u2a[2]])
        P[name] = {
            "fused1x1": dev(w_cat, s_cat, t_cat),
            "b1b": dev(*unit3x3(o1a, o1b)),
            "b2b": dev(*unit3x3(o2a, o2b)),
            "b3b": dev(*unit1x1(cin, o3)),
        }

    # logits Unit3D: 1x1x1 conv, bias, no BN, no activation
    wl = (rng.standard_normal((400, 1024)) *
          np.sqrt(2.0 / 1024)).astype(np.float32)
    sl = np.ones(400, np.float32)
    bl = (rng.standard_normal(400) * 0.01).astype(np.float32)
    P["logits"] = dev(np.ascontiguousarray(wl.T), sl, bl)
    return P


# ----------------------------------------------------------------------------
# RGBEncoder.forward == InceptionI3d.forward
# ----------------------------------------------------------------------------
def rgb_encoder_forward(x, P):
    """x: (N, 3, T, H, W) f32 -> (N, 400, T') logits, as in InceptionI3d."""
    x = jnp.transpose(x, (0, 2, 3, 4, 1)).astype(jnp.bfloat16)  # -> NDHWC
    w1, s1, b1 = P["Conv3d_1a_7x7"]
    x = stem_conv7x7s2(x, w1, s1, b1)                    # Conv3d_1a_7x7 (s=2)
    x = maxpool3d_same(x, (1, 3, 3), (1, 2, 2))          # MaxPool3d_2a_3x3
    x = conv1x1(x, P["Conv3d_2b_1x1"])                   # Conv3d_2b_1x1
    x = conv3x3_same(x, *P["Conv3d_2c_3x3"])             # Conv3d_2c_3x3
    x = maxpool3d_same(x, (1, 3, 3), (1, 2, 2))          # MaxPool3d_3a_3x3
    x = inception_apply(x, P["Mixed_3b"], INCEPTION_CFG["Mixed_3b"][1])
    x = inception_apply(x, P["Mixed_3c"], INCEPTION_CFG["Mixed_3c"][1])
    x = maxpool3d_same(x, (3, 3, 3), (2, 2, 2))          # MaxPool3d_4a_3x3
    for name in ("Mixed_4b", "Mixed_4c", "Mixed_4d", "Mixed_4e", "Mixed_4f"):
        x = inception_apply(x, P[name], INCEPTION_CFG[name][1])
    x = maxpool3d_same(x, (2, 2, 2), (2, 2, 2))          # MaxPool3d_5a_2x2
    # TODO(synk): Mixed_5b/5c run at only a few rows; fusing each whole module
    # into a single pallas_call would cut per-call launch overhead further.
    x = inception_apply(x, P["Mixed_5b"], INCEPTION_CFG["Mixed_5b"][1])
    x = inception_apply(x, P["Mixed_5c"], INCEPTION_CFG["Mixed_5c"][1])

    x = avgpool3d_valid(x, (2, 7, 7))                    # AvgPool3d([2,7,7])
    # dropout: inference identity
    wl, sl, bl = P["logits"]
    n2, t2, h2, w2, c2 = x.shape
    y = fused_matmul(x.reshape(n2 * t2 * h2 * w2, c2).astype(jnp.bfloat16),
                     wl, sl, bl, apply_relu=False, out_dtype=jnp.float32)
    y = y.reshape(n2, t2, h2, w2, wl.shape[1])
    y = jnp.squeeze(y, axis=(2, 3))                      # spatial squeeze
    return jnp.transpose(y, (0, 2, 1))                   # (N, 400, T')


# ----------------------------------------------------------------------------
# Self tests for the Pallas kernels
# ----------------------------------------------------------------------------
def _selftest():
    rng = np.random.RandomState(0)

    # Fused matmul (tiled path: m=1536 -> tm=768, grid=2).
    a = jnp.asarray(rng.standard_normal((1536, 96)), jnp.bfloat16)
    b = jnp.asarray(rng.standard_normal((96, 80)), jnp.bfloat16)
    s = jnp.asarray(rng.standard_normal(80), jnp.float32)
    t = jnp.asarray(rng.standard_normal(80), jnp.float32)
    got = np.asarray(fused_matmul(a, b, s, t, apply_relu=True,
                                  out_dtype=jnp.float32))
    want = np.asarray(jnp.maximum(
        jnp.dot(a.astype(jnp.float32), b.astype(jnp.float32),
                precision=lax.Precision.HIGHEST) * s + t, 0.0))
    np.testing.assert_allclose(got, want, rtol=2e-2, atol=2e-2)

    # 3x3x3 stride-1 'same' row-shift conv (n=2 exercises the sample decode).
    x = jnp.asarray(rng.standard_normal((2, 4, 8, 8, 16)), jnp.bfloat16)
    wt = (rng.standard_normal((32, 16, 3, 3, 3)) * 0.2).astype(np.float32)
    wt = np.asarray(jnp.asarray(wt, jnp.bfloat16).astype(jnp.float32))
    sc = jnp.ones(32, jnp.float32)
    sh = jnp.zeros(32, jnp.float32)
    got = np.asarray(conv3x3_same(x, jnp.asarray(_fold_taps(wt), jnp.bfloat16),
                                  sc, sh, apply_relu=False,
                                  out_dtype=jnp.float32))
    want = np.asarray(lax.conv_general_dilated(
        x.astype(jnp.float32),
        jnp.asarray(np.transpose(wt, (2, 3, 4, 1, 0)), jnp.float32),
        window_strides=(1, 1, 1), padding=((1, 1), (1, 1), (1, 1)),
        dimension_numbers=("NDHWC", "DHWIO", "NDHWC"),
        precision=lax.Precision.HIGHEST))
    np.testing.assert_allclose(got, want, rtol=2e-2, atol=2e-2)

    # 7x7x7 stride-2 'same' stem conv via space-to-depth tap conv.
    x = jnp.asarray(rng.standard_normal((2, 4, 8, 8, 3)), jnp.bfloat16)
    wt = (rng.standard_normal((16, 3, 7, 7, 7)) * 0.1).astype(np.float32)
    wt = np.asarray(jnp.asarray(wt, jnp.bfloat16).astype(jnp.float32))
    sc = jnp.ones(16, jnp.float32)
    sh = jnp.zeros(16, jnp.float32)
    got = np.asarray(stem_conv7x7s2(
        x, jnp.asarray(_pack_stem_weight(wt), jnp.bfloat16), sc, sh,
        apply_relu=False, out_dtype=jnp.float32))
    want = np.asarray(lax.conv_general_dilated(
        x.astype(jnp.float32),
        jnp.asarray(np.transpose(wt, (2, 3, 4, 1, 0)), jnp.float32),
        window_strides=(2, 2, 2), padding=((2, 3), (2, 3), (2, 3)),
        dimension_numbers=("NDHWC", "DHWIO", "NDHWC"),
        precision=lax.Precision.HIGHEST))
    np.testing.assert_allclose(got, want, rtol=2e-2, atol=2e-2)


# ----------------------------------------------------------------------------
if __name__ == "__main__":
    _selftest()

    # Small deterministic test input (N, C=3, T, H, W).  The network
    # downsamples spatial dims 32x; 64x64 spatial / 16 frames keep every layer
    # non-degenerate while staying fast (see avgpool3d_valid TODO about the
    # fixed 7x7 window at the canonical 224x224 resolution).
    key = jax.random.PRNGKey(0)
    x = jax.random.normal(key, (1, 3, 16, 64, 64), dtype=jnp.float32)

    params = build_params()
    fwd = jax.jit(rgb_encoder_forward)
    out = jax.block_until_ready(fwd(x, params))

    assert out.shape == (1, 400, 1), out.shape
    assert bool(jnp.all(jnp.isfinite(out)))
    print("KERNEL_OK")
</pallas_src>

<mosaic_0001>
module attributes {stable_mosaic.version = 11 : i64} {
  func.func @_matmul_affine_kernel(%arg0: i32, %arg1: memref<768x96xbf16, #tpu.memory_space<vmem>>, %arg2: memref<96x80xbf16, #tpu.memory_space<vmem>>, %arg3: memref<1x80xf32, #tpu.memory_space<vmem>>, %arg4: memref<1x80xf32, #tpu.memory_space<vmem>>, %arg5: memref<768x80xf32, #tpu.memory_space<vmem>>) attributes {dimension_semantics = [#tpu.dimension_semantics<parallel>], iteration_bounds = array<i64: 2>, scalar_prefetch = 0 : i64, scratch_operands = 0 : i64, tpu.core_type = #tpu.core_type<tc>, window_params = [{transform_indices = @transform_0, window_bounds = array<i64: 768, 96>}, {pipeline_mode = #tpu.pipeline_mode<synchronous>, transform_indices = @transform_1, window_bounds = array<i64: 96, 80>}, {pipeline_mode = #tpu.pipeline_mode<synchronous>, transform_indices = @transform_2, window_bounds = array<i64: 1, 80>}, {pipeline_mode = #tpu.pipeline_mode<synchronous>, transform_indices = @transform_3, window_bounds = array<i64: 1, 80>}, {transform_indices = @transform_4, window_bounds = array<i64: 768, 80>}]} {
    %c0 = arith.constant 0 : index
    %c0_0 = arith.constant 0 : index
    %0 = vector.load %arg1[%c0, %c0_0] : memref<768x96xbf16, #tpu.memory_space<vmem>>, vector<768x96xbf16>
    %c0_1 = arith.constant 0 : index
    %c0_2 = arith.constant 0 : index
    %1 = vector.load %arg2[%c0_1, %c0_2] : memref<96x80xbf16, #tpu.memory_space<vmem>>, vector<96x80xbf16>
    %cst = arith.constant dense<0.000000e+00> : vector<768x80xf32>
    %2 = tpu.matmul %0, %1, %cst {dimension_numbers = #tpu.dot_dimension_numbers<[1], [0], [0], [1], [0, 0, 1, 1], [], []>} : vector<768x96xbf16>, vector<96x80xbf16>, vector<768x80xf32> -> vector<768x80xf32>
    %c0_3 = arith.constant 0 : index
    %c0_4 = arith.constant 0 : index
    %3 = vector.load %arg3[%c0_3, %c0_4] : memref<1x80xf32, #tpu.memory_space<vmem>>, vector<1x80xf32>
    %4 = vector.broadcast %3 : vector<1x80xf32> to vector<768x80xf32>
    %5 = arith.mulf %2, %4 : vector<768x80xf32>
    %c0_5 = arith.constant 0 : index
    %c0_6 = arith.constant 0 : index
    %6 = vector.load %arg4[%c0_5, %c0_6] : memref<1x80xf32, #tpu.memory_space<vmem>>, vector<1x80xf32>
    %7 = vector.broadcast %6 : vector<1x80xf32> to vector<768x80xf32>
    %8 = arith.addf %5, %7 : vector<768x80xf32>
    %cst_7 = arith.constant 0.000000e+00 : f32
    %9 = vector.broadcast %cst_7 : f32 to vector<768x80xf32>
    %10 = arith.maximumf %8, %9 : vector<768x80xf32>
    %c0_8 = arith.constant 0 : index
    %c0_9 = arith.constant 0 : index
    %11 = vector.load %arg5[%c0_8, %c0_9] : memref<768x80xf32, #tpu.memory_space<vmem>>, vector<768x80xf32>
    tpu.vector_store %arg5[%c0_8, %c0_9], %10 {strides = array<i32>} : memref<768x80xf32, #tpu.memory_space<vmem>>, vector<768x80xf32>,
    return
  }
  func.func @transform_0(%arg0: i32) -> (i32, i32) {
    %c0_i32 = arith.constant 0 : i32
    %c0_i32_0 = arith.constant 0 : i32
    return %arg0, %c0_i32 : i32, i32
  }
  func.func @transform_1(%arg0: i32) -> (i32, i32) {
    %c0_i32 = arith.constant 0 : i32
    %c0_i32_0 = arith.constant 0 : i32
    %c0_i32_1 = arith.constant 0 : i32
    return %c0_i32, %c0_i32_0 : i32, i32
  }
  func.func @transform_2(%arg0: i32) -> (i32, i32) {
    %c0_i32 = arith.constant 0 : i32
    %c0_i32_0 = arith.constant 0 : i32
    %c0_i32_1 = arith.constant 0 : i32
    return %c0_i32, %c0_i32_0 : i32, i32
  }
  func.func @transform_3(%arg0: i32) -> (i32, i32) {
    %c0_i32 = arith.constant 0 : i32
    %c0_i32_0 = arith.constant 0 : i32
    %c0_i32_1 = arith.constant 0 : i32
    return %c0_i32, %c0_i32_0 : i32, i32
  }
  func.func @transform_4(%arg0: i32) -> (i32, i32) {
    %c0_i32 = arith.constant 0 : i32
    %c0_i32_0 = arith.constant 0 : i32
    return %arg0, %c0_i32 : i32, i32
  }
}

</mosaic_0001>

<llo_original>
// kernel: tpu_custom_call.1
$region0: #{tpu_custom_call.1}
  #allocation0 [shape = 'u32[]', space=smem, size = 0x4, offset = 0x4, fixed_abs, tag = 'smem constant byte address 0x4 - core index']
  #allocation1 [shape = 'u32[144,128]{1,0:T(1,128)}', space=vmem, size = 0x12000, scoped, tag = 'internal scratch']
  %s0 = inlined_call_operand.vmem [shape: bf16[1536,96], index: 0, kind: input, shape index: {}]
  %s1 = inlined_call_operand.vmem [shape: bf16[96,80], index: 1, kind: input, shape index: {}]
  %s2 = inlined_call_operand.vmem [shape: f32[1,80], index: 2, kind: input, shape index: {}]
  %s3 = inlined_call_operand.vmem [shape: f32[1,80], index: 3, kind: input, shape index: {}]
  %s4 = inlined_call_operand.vmem [shape: f32[1536,80], index: 4, kind: output, shape index: {}]
  %s5 = sld [smem:[#allocation0]]
  $region49: #{tpu_custom_call.1} parent=0
    _
  %s7 = ssub.s32 1, %s5
  %s8 = scalar_select 0, %s7, %s5
  loop: start=0, step=1, limit=4
  $region2: #{tpu_custom_call.1} parent=0 // loop_pre_header
    _
  $region3: #{tpu_custom_call.1} parent=0 // loop_header
    %s10 = sphi 0, %s14
    %p11 = scmp.ge.s32.totalorder %s10, 4
    %s20 = sphi 0, %s22
    %s23 = sphi 0, %s20
    %s24 = sphi 0, %s23
    %s40 = sphi 0, %s24
    %s44 = sphi 0, %s44
    %s46 = sphi 0, %s44
    %s47 = sphi 0, %s46
    %s61 = sphi 0, %s47
    %s65 = sphi 0, %s65
    %s67 = sphi 0, %s65
    %s68 = sphi 0, %s67
    %s82 = sphi 0, %s68
    %s86 = sphi 0, %s86
    %s88 = sphi 0, %s86
    %s89 = sphi 0, %s88
    %s103 = sphi 0, %s89
    %s109 = sphi 0, %s111
    %s112 = sphi 0, %s109
    %s113 = sphi 0, %s112
    %s129 = sphi 0, %s113
  $region4: #{tpu_custom_call.1} parent=0 // loop_header_branch
    %13 = sbr.rel (%p11) target = $region8
  $region5: #{tpu_custom_call.1} parent=0 // loop_body
    %s15 = ssub.s32 %s10, 1
    %s16 = ssub.s32 %s10, 2
    %s17 = sadd.s32 %s10, 1
    %s18 = ssub.s32 %s10, %s17
    %p19 = scmp.eq.s32.totalorder %s18, 0
    %s21 = sadd.s32 %s20, 1
    %s22 = scalar_select %p19, %s20, %s21
    %p25 = pneg %p19
    %p26 = scmp.eq.s32.totalorder %s10, 1
    %p27 = por %p25, %p26
    %p28 = scmp.ne.s32.totalorder %s20, %s23
    %p29 = scmp.eq.s32.totalorder %s10, 0
    %p30 = por %p28, %p29
    %p31 = scmp.ne.s32.totalorder %s20, %s23
    %p32 = scmp.eq.s32.totalorder %s15, 1
    %p33 = por %p31, %p32
    %p34 = scmp.ne.s32.totalorder %s23, %s24
    %p35 = scmp.eq.s32.totalorder %s15, 0
    %p36 = por %p34, %p35
    %p37 = scmp.ne.s32.totalorder %s23, %s24
    %p38 = scmp.eq.s32.totalorder %s16, 1
    %p39 = por %p37, %p38
    %p41 = scmp.ne.s32.totalorder %s24, %s40
    %p42 = scmp.eq.s32.totalorder %s16, 0
    %p43 = por %p41, %p42
    %s45 = sadd.s32 %s44, 1
    %p48 = scmp.eq.s32.totalorder %s10, 1
    %p49 = scmp.ne.s32.totalorder %s44, %s46
    %p50 = scmp.eq.s32.totalorder %s10, 0
    %p51 = por %p49, %p50
    %p52 = scmp.ne.s32.totalorder %s44, %s46
    %p53 = scmp.eq.s32.totalorder %s15, 1
    %p54 = por %p52, %p53
    %p55 = scmp.ne.s32.totalorder %s46, %s47
    %p56 = scmp.eq.s32.totalorder %s15, 0
    %p57 = por %p55, %p56
    %p58 = scmp.ne.s32.totalorder %s46, %s47
    %p59 = scmp.eq.s32.totalorder %s16, 1
    %p60 = por %p58, %p59
    %p62 = scmp.ne.s32.totalorder %s47, %s61
    %p63 = scmp.eq.s32.totalorder %s16, 0
    %p64 = por %p62, %p63
    %s66 = sadd.s32 %s65, 1
    %p69 = scmp.eq.s32.totalorder %s10, 1
    %p70 = scmp.ne.s32.totalorder %s65, %s67
    %p71 = scmp.eq.s32.totalorder %s10, 0
    %p72 = por %p70, %p71
    %p73 = scmp.ne.s32.totalorder %s65, %s67
    %p74 = scmp.eq.s32.totalorder %s15, 1
    %p75 = por %p73, %p74
    %p76 = scmp.ne.s32.totalorder %s67, %s68
    %p77 = scmp.eq.s32.totalorder %s15, 0
    %p78 = por %p76, %p77
    %p79 = scmp.ne.s32.totalorder %s67, %s68
    %p80 = scmp.eq.s32.totalorder %s16, 1
    %p81 = por %p79, %p80
    %p83 = scmp.ne.s32.totalorder %s68, %s82
    %p84 = scmp.eq.s32.totalorder %s16, 0
    %p85 = por %p83, %p84
    %s87 = sadd.s32 %s86, 1
    %p90 = scmp.eq.s32.totalorder %s10, 1
    %p91 = scmp.ne.s32.totalorder %s86, %s88
    %p92 = scmp.eq.s32.totalorder %s10, 0
    %p93 = por %p91, %p92
    %p94 = scmp.ne.s32.totalorder %s86, %s88
    %p95 = scmp.eq.s32.totalorder %s15, 1
    %p96 = por %p94, %p95
    %p97 = scmp.ne.s32.totalorder %s88, %s89
    %p98 = scmp.eq.s32.totalorder %s15, 0
    %p99 = por %p97, %p98
    %p100 = scmp.ne.s32.totalorder %s88, %s89
    %p101 = scmp.eq.s32.totalorder %s16, 1
    %p102 = por %p100, %p101
    %p104 = scmp.ne.s32.totalorder %s89, %s103
    %p105 = scmp.eq.s32.totalorder %s16, 0
    %p106 = por %p104, %p105
    %s107 = ssub.s32 %s10, %s17
    %p108 = scmp.eq.s32.totalorder %s107, 0
    %s110 = sadd.s32 %s109, 1
    %s111 = scalar_select %p108, %s109, %s110
    %p114 = pneg %p108
    %p115 = scmp.eq.s32.totalorder %s10, 1
    %p116 = por %p114, %p115
    %p117 = scmp.ne.s32.totalorder %s109, %s112
    %p118 = scmp.eq.s32.totalorder %s10, 0
    %p119 = por %p117, %p118
    %p120 = scmp.ne.s32.totalorder %s109, %s112
    %p121 = scmp.eq.s32.totalorder %s15, 1
    %p122 = por %p120, %p121
    %p123 = scmp.ne.s32.totalorder %s112, %s113
    %p124 = scmp.eq.s32.totalorder %s15, 0
    %p125 = por %p123, %p124
    %p126 = scmp.ne.s32.totalorder %s112, %s113
    %p127 = scmp.eq.s32.totalorder %s16, 1
    %p128 = por %p126, %p127
    %p130 = scmp.ne.s32.totalorder %s113, %s129
    %p131 = scmp.eq.s32.totalorder %s16, 0
    %p132 = por %p130, %p131
    %p133 = scmp.le.s32.totalorder 1, %s10
    %p134 = scmp.lt.s32.totalorder %s10, 3
    %p135 = pnand %p133, %p134
    %p136 = pneg %p135
    // Predicated region
    $region9: #{tpu_custom_call.1} parent=5 // pred_check
      _
    $region10: #{tpu_custom_call.1} parent=5 // pred_check_branch
      %138 = sbr.rel (%p135) target = $region12
    $region11: #{tpu_custom_call.1} parent=5 // pred_region
      %s139 = ssub.s32 %s10, 1
      // Predicated region
      $region13: #{tpu_custom_call.1} parent=11 // pred_check
        %p140 = pneg %p57
      $region14: #{tpu_custom_call.1} parent=11 // pred_check_branch
        %142 = sbr.rel (%p140) target = $region16
      $region15: #{tpu_custom_call.1} parent=11 // pred_region
        _
      $region16: #{tpu_custom_call.1} parent=11 // pred_fallthru
        _
      // Predicated region
      $region17: #{tpu_custom_call.1} parent=11 // pred_check
        %p143 = pneg %p78
      $region18: #{tpu_custom_call.1} parent=11 // pred_check_branch
        %145 = sbr.rel (%p143) target = $region20
      $region19: #{tpu_custom_call.1} parent=11 // pred_region
        _
      $region20: #{tpu_custom_call.1} parent=11 // pred_fallthru
        _
      // Predicated region
      $region21: #{tpu_custom_call.1} parent=11 // pred_check
        %p146 = pneg %p99
      $region22: #{tpu_custom_call.1} parent=11 // pred_check_branch
        %148 = sbr.rel (%p146) target = $region24
      $region23: #{tpu_custom_call.1} parent=11 // pred_region
        _
      $region24: #{tpu_custom_call.1} parent=11 // pred_fallthru
        _
    $region12: #{tpu_custom_call.1} parent=5 // pred_fallthru
      _
    %p149 = scmp.lt.s32.totalorder %s10, 2
    // Predicated region
    $region25: #{tpu_custom_call.1} parent=5 // pred_check
      %p150 = pneg %p149
    $region26: #{tpu_custom_call.1} parent=5 // pred_check_branch
      %152 = sbr.rel (%p150) target = $region28
    $region27: #{tpu_custom_call.1} parent=5 // pred_region
      // Predicated region
      $region29: #{tpu_custom_call.1} parent=27 // pred_check
        %p153 = pneg %p30
      $region30: #{tpu_custom_call.1} parent=27 // pred_check_branch
        %155 = sbr.rel (%p153) target = $region32
      $region31: #{tpu_custom_call.1} parent=27 // pred_region
        %s156 = smul.u32 96, %s10
        %p157 = scmp.lt.s32.totalorder %s156, 191
        %s158 = scalar_select %p157, %s156, 191
        %s159 = smul.addr %s158, 4
        %s160 = scalar_lea.vmem %s0, %s159
        %s161 = smul.u32 96, %s10
      $region32: #{tpu_custom_call.1} parent=27 // pred_fallthru
        _
    $region28: #{tpu_custom_call.1} parent=5 // pred_fallthru
      _
    %p162 = scmp.le.s32.totalorder 1, %s10
    %p163 = scmp.lt.s32.totalorder %s10, 3
    %p164 = pnand %p162, %p163
    %p165 = pneg %p164
    // Predicated region
    $region33: #{tpu_custom_call.1} parent=5 // pred_check
      _
    $region34: #{tpu_custom_call.1} parent=5 // pred_check_branch
      %167 = sbr.rel (%p164) target = $region36
    $region35: #{tpu_custom_call.1} parent=5 // pred_region
      %s168 = ssub.s32 %s10, 1
      %s169 = smul.u32 96, %s15
      %p170 = scmp.lt.s32.totalorder %s169, 191
      %s171 = scalar_select %p170, %s169, 191
      %s172 = smul.addr %s171, 4
      %s173 = scalar_lea.vmem %s0, %s172
      %p174 = pneg %p36
      %p175 = pneg %p33
      %p176 = pneg %p57
      %p177 = pneg %p54
      %p178 = pneg %p78
      %p179 = pneg %p75
      %p180 = pneg %p99
      %p181 = pneg %p96
      %p182 = pneg %p125
      %p183 = pneg %p122
      %s184 = smul.u32 96, %s15
      %p185 = scmp.lt.s32.totalorder %s184, 191
      %s186 = scalar_select %p185, %s184, 191
      %s187 = smul.addr %s186, 8
      %s188 = scalar_lea.vmem %s4, %s187
      %s189 = smul.u32 96, %s15
      %p190 = scmp.lt.s32.totalorder %s189, 191
      %s191 = scalar_select %p190, %s189, 191
      %s192 = smul.addr %s191, 4
      %s193 = scalar_lea.vmem %s0, %s192
      %s194 = smul.u32 96, %s15
      %s195 = smul.u32 96, %s15
      %p196 = scmp.lt.s32.totalorder %s195, 191
      %s197 = scalar_select %p196, %s195, 191
      %s198 = smul.addr %s197, 8
      %s199 = scalar_lea.vmem %s4, %s198
      %s200 = smul.u32 96, %s15
      %v202 = vld [vmem:[%s193] sm:$0xf]
      %v203 = vld [vmem:[%s193 + $0x4] sm:$0xf]
      %v204 = vld [vmem:[%s193 + $0x8] sm:$0xf]
      %v205 = vld [vmem:[%s193 + $0xc] sm:$0xf]
      %v206 = vld [vmem:[%s193 + $0x10] sm:$0xf]
      %v207 = vld [vmem:[%s193 + $0x14] sm:$0xf]
      %v208 = vld [vmem:[%s193 + $0x18] sm:$0xf]
      %v209 = vld [vmem:[%s193 + $0x1c] sm:$0xf]
      %v210 = vld [vmem:[%s193 + $0x20] sm:$0xf]
      %v211 = vld [vmem:[%s193 + $0x24] sm:$0xf]
      %v212 = vld [vmem:[%s193 + $0x28] sm:$0xf]
      %v213 = vld [vmem:[%s193 + $0x2c] sm:$0xf]
      %v214 = vld [vmem:[%s193 + $0x30] sm:$0xf]
      %v215 = vld [vmem:[%s193 + $0x34] sm:$0xf]
      %v216 = vld [vmem:[%s193 + $0x38] sm:$0xf]
      %v217 = vld [vmem:[%s193 + $0x3c] sm:$0xf]
      %v218 = vld [vmem:[%s193 + $0x40] sm:$0xf]
      %v219 = vld [vmem:[%s193 + $0x44] sm:$0xf]
      %v220 = vld [vmem:[%s193 + $0x48] sm:$0xf]
      %v221 = vld [vmem:[%s193 + $0x4c] sm:$0xf]
      %v222 = vld [vmem:[%s193 + $0x50] sm:$0xf]
      %v223 = vld [vmem:[%s193 + $0x54] sm:$0xf]
      %v224 = vld [vmem:[%s193 + $0x58] sm:$0xf]
      %v225 = vld [vmem:[%s193 + $0x5c] sm:$0xf]
      %v226 = vld [vmem:[%s193 + $0x60] sm:$0xf]
      %v227 = vld [vmem:[%s193 + $0x64] sm:$0xf]
      %v228 = vld [vmem:[%s193 + $0x68] sm:$0xf]
      %v229 = vld [vmem:[%s193 + $0x6c] sm:$0xf]
      %v230 = vld [vmem:[%s193 + $0x70] sm:$0xf]
      %v231 = vld [vmem:[%s193 + $0x74] sm:$0xf]
      %v232 = vld [vmem:[%s193 + $0x78] sm:$0xf]
      %v233 = vld [vmem:[%s193 + $0x7c] sm:$0xf]
      %v234 = vld [vmem:[%s193 + $0x80] sm:$0xf]
      %v235 = vld [vmem:[%s193 + $0x84] sm:$0xf]
      %v236 = vld [vmem:[%s193 + $0x88] sm:$0xf]
      %v237 = vld [vmem:[%s193 + $0x8c] sm:$0xf]
      %v238 = vld [vmem:[%s193 + $0x90] sm:$0xf]
      %v239 = vld [vmem:[%s193 + $0x94] sm:$0xf]
      %v240 = vld [vmem:[%s193 + $0x98] sm:$0xf]
      %v241 = vld [vmem:[%s193 + $0x9c] sm:$0xf]
      %v242 = vld [vmem:[%s193 + $0xa0] sm:$0xf]
      %v243 = vld [vmem:[%s193 + $0xa4] sm:$0xf]
      %v244 = vld [vmem:[%s193 + $0xa8] sm:$0xf]
      %v245 = vld [vmem:[%s193 + $0xac] sm:$0xf]
      %v246 = vld [vmem:[%s193 + $0xb0] sm:$0xf]
      %v247 = vld [vmem:[%s193 + $0xb4] sm:$0xf]
      %v248 = vld [vmem:[%s193 + $0xb8] sm:$0xf]
      %v249 = vld [vmem:[%s193 + $0xbc] sm:$0xf]
      %v250 = vld [vmem:[%s193 + $0xc0] sm:$0xf]
      %v251 = vld [vmem:[%s193 + $0xc4] sm:$0xf]
      %v252 = vld [vmem:[%s193 + $0xc8] sm:$0xf]
      %v253 = vld [vmem:[%s193 + $0xcc] sm:$0xf]
      %v254 = vld [vmem:[%s193 + $0xd0] sm:$0xf]
      %v255 = vld [vmem:[%s193 + $0xd4] sm:$0xf]
      %v256 = vld [vmem:[%s193 + $0xd8] sm:$0xf]
      %v257 = vld [vmem:[%s193 + $0xdc] sm:$0xf]
      %v258 = vld [vmem:[%s193 + $0xe0] sm:$0xf]
      %v259 = vld [vmem:[%s193 + $0xe4] sm:$0xf]
      %v260 = vld [vmem:[%s193 + $0xe8] sm:$0xf]
      %v261 = vld [vmem:[%s193 + $0xec] sm:$0xf]
      %v262 = vld [vmem:[%s193 + $0xf0] sm:$0xf]
      %v263 = vld [vmem:[%s193 + $0xf4] sm:$0xf]
      %v264 = vld [vmem:[%s193 + $0xf8] sm:$0xf]
      %v265 = vld [vmem:[%s193 + $0xfc] sm:$0xf]
      %v266 = vld [vmem:[%s193 + $0x100] sm:$0xf]
      %v267 = vld [vmem:[%s193 + $0x104] sm:$0xf]
      %v268 = vld [vmem:[%s193 + $0x108] sm:$0xf]
      %v269 = vld [vmem:[%s193 + $0x10c] sm:$0xf]
      %v270 = vld [vmem:[%s193 + $0x110] sm:$0xf]
      %v271 = vld [vmem:[%s193 + $0x114] sm:$0xf]
      %v272 = vld [vmem:[%s193 + $0x118] sm:$0xf]
      %v273 = vld [vmem:[%s193 + $0x11c] sm:$0xf]
      %v274 = vld [vmem:[%s193 + $0x120] sm:$0xf]
      %v275 = vld [vmem:[%s193 + $0x124] sm:$0xf]
      %v276 = vld [vmem:[%s193 + $0x128] sm:$0xf]
      %v277 = vld [vmem:[%s193 + $0x12c] sm:$0xf]
      %v278 = vld [vmem:[%s193 + $0x130] sm:$0xf]
      %v279 = vld [vmem:[%s193 + $0x134] sm:$0xf]
      %v280 = vld [vmem:[%s193 + $0x138] sm:$0xf]
      %v281 = vld [vmem:[%s193 + $0x13c] sm:$0xf]
      %v282 = vld [vmem:[%s193 + $0x140] sm:$0xf]
      %v283 = vld [vmem:[%s193 + $0x144] sm:$0xf]
      %v284 = vld [vmem:[%s193 + $0x148] sm:$0xf]
      %v285 = vld [vmem:[%s193 + $0x14c] sm:$0xf]
      %v286 = vld [vmem:[%s193 + $0x150] sm:$0xf]
      %v287 = vld [vmem:[%s193 + $0x154] sm:$0xf]
      %v288 = vld [vmem:[%s193 + $0x158] sm:$0xf]
      %v289 = vld [vmem:[%s193 + $0x15c] sm:$0xf]
      %v290 = vld [vmem:[%s193 + $0x160] sm:$0xf]
      %v291 = vld [vmem:[%s193 + $0x164] sm:$0xf]
      %v292 = vld [vmem:[%s193 + $0x168] sm:$0xf]
      %v293 = vld [vmem:[%s193 + $0x16c] sm:$0xf]
      %v294 = vld [vmem:[%s193 + $0x170] sm:$0xf]
      %v295 = vld [vmem:[%s193 + $0x174] sm:$0xf]
      %v296 = vld [vmem:[%s193 + $0x178] sm:$0xf]
      %v297 = vld [vmem:[%s193 + $0x17c] sm:$0xf]
      %v298 = vld [vmem:[%s1] sm:$0xf]
      %v299 = vld [vmem:[%s1 + $0x4] sm:$0xf]
      %v300 = vld [vmem:[%s1 + $0x8] sm:$0xf]
      %v301 = vld [vmem:[%s1 + $0xc] sm:$0xf]
      %v302 = vld [vmem:[%s1 + $0x10] sm:$0xf]
      %v303 = vld [vmem:[%s1 + $0x14] sm:$0xf]
      %v304 = vld [vmem:[%s1 + $0x18] sm:$0xf]
      %v305 = vld [vmem:[%s1 + $0x1c] sm:$0xf]
      %v306 = vld [vmem:[%s1 + $0x20] sm:$0xf]
      %v307 = vld [vmem:[%s1 + $0x24] sm:$0xf]
      %v308 = vld [vmem:[%s1 + $0x28] sm:$0xf]
      %v309 = vld [vmem:[%s1 + $0x2c] sm:$0xf]
      %v406 = vunpack.c.l.b16 %v202
      %v407 = vunpack.c.l.b16 %v203
      %v408 = vunpack.c.l.b16 %v204
      %v409 = vunpack.c.l.b16 %v205
      %v410 = vunpack.c.l.b16 %v206
      %v411 = vunpack.c.l.b16 %v207
      %v412 = vunpack.c.l.b16 %v208
      %v413 = vunpack.c.l.b16 %v209
      %v414 = vunpack.c.l.b16 %v210
      %v415 = vunpack.c.l.b16 %v211
      %v416 = vunpack.c.l.b16 %v212
      %v417 = vunpack.c.l.b16 %v213
      %v418 = vunpack.c.l.b16 %v214
      %v419 = vunpack.c.l.b16 %v215
      %v420 = vunpack.c.l.b16 %v216
      %v421 = vunpack.c.l.b16 %v217
      %v422 = vunpack.c.l.b16 %v218
      %v423 = vunpack.c.l.b16 %v219
      %v424 = vunpack.c.l.b16 %v220
      %v425 = vunpack.c.l.b16 %v221
      %v426 = vunpack.c.l.b16 %v222
      %v427 = vunpack.c.l.b16 %v223
      %v428 = vunpack.c.l.b16 %v224
      %v429 = vunpack.c.l.b16 %v225
      %v430 = vunpack.c.l.b16 %v226
      %v431 = vunpack.c.l.b16 %v227
      %v432 = vunpack.c.l.b16 %v228
      %v433 = vunpack.c.l.b16 %v229
      %v434 = vunpack.c.l.b16 %v230
      %v435 = vunpack.c.l.b16 %v231
      %v436 = vunpack.c.l.b16 %v232
      %v437 = vunpack.c.l.b16 %v233
      %v438 = vunpack.c.l.b16 %v234
      %v439 = vunpack.c.l.b16 %v235
      %v440 = vunpack.c.l.b16 %v236
      %v441 = vunpack.c.l.b16 %v237
      %v442 = vunpack.c.l.b16 %v238
      %v443 = vunpack.c.l.b16 %v239
      %v444 = vunpack.c.l.b16 %v240
      %v445 = vunpack.c.l.b16 %v241
      %v446 = vunpack.c.l.b16 %v242
      %v447 = vunpack.c.l.b16 %v243
      %v448 = vunpack.c.l.b16 %v244
      %v449 = vunpack.c.l.b16 %v245
      %v450 = vunpack.c.l.b16 %v246
      %v451 = vunpack.c.l.b16 %v247
      %v452 = vunpack.c.l.b16 %v248
      %v453 = vunpack.c.l.b16 %v249
      %v454 = vunpack.c.l.b16 %v250
      %v455 = vunpack.c.l.b16 %v251
      %v456 = vunpack.c.l.b16 %v252
      %v457 = vunpack.c.l.b16 %v253
      %v458 = vunpack.c.l.b16 %v254
      %v459 = vunpack.c.l.b16 %v255
      %v460 = vunpack.c.l.b16 %v256
      %v461 = vunpack.c.l.b16 %v257
      %v462 = vunpack.c.l.b16 %v258
      %v463 = vunpack.c.l.b16 %v259
      %v464 = vunpack.c.l.b16 %v260
      %v465 = vunpack.c.l.b16 %v261
      %v466 = vunpack.c.l.b16 %v262
      %v467 = vunpack.c.l.b16 %v263
      %v468 = vunpack.c.l.b16 %v264
      %v469 = vunpack.c.l.b16 %v265
      %v470 = vunpack.c.l.b16 %v266
      %v471 = vunpack.c.l.b16 %v267
      %v472 = vunpack.c.l.b16 %v268
      %v473 = vunpack.c.l.b16 %v269
      %v474 = vunpack.c.l.b16 %v270
      %v475 = vunpack.c.l.b16 %v271
      %v476 = vunpack.c.l.b16 %v272
      %v477 = vunpack.c.l.b16 %v273
      %v478 = vunpack.c.l.b16 %v274
      %v479 = vunpack.c.l.b16 %v275
      %v480 = vunpack.c.l.b16 %v276
      %v481 = vunpack.c.l.b16 %v277
      %v482 = vunpack.c.l.b16 %v278
      %v483 = vunpack.c.l.b16 %v279
      %v484 = vunpack.c.l.b16 %v280
      %v485 = vunpack.c.l.b16 %v281
      %v486 = vunpack.c.l.b16 %v282
      %v487 = vunpack.c.l.b16 %v283
      %v488 = vunpack.c.l.b16 %v284
      %v489 = vunpack.c.l.b16 %v285
      %v490 = vunpack.c.l.b16 %v286
      %v491 = vunpack.c.l.b16 %v287
      %v492 = vunpack.c.l.b16 %v288
      %v493 = vunpack.c.l.b16 %v289
      %v494 = vunpack.c.l.b16 %v290
      %v495 = vunpack.c.l.b16 %v291
      %v496 = vunpack.c.l.b16 %v292
      %v497 = vunpack.c.l.b16 %v293
      %v498 = vunpack.c.l.b16 %v294
      %v499 = vunpack.c.l.b16 %v295
      %v500 = vunpack.c.l.b16 %v296
      %v501 = vunpack.c.l.b16 %v297
      %v502 = vpack.c.b16 %v407, %v406
      %v503 = vpack.c.b16 %v409, %v408
      %v504 = vpack.c.b16 %v411, %v410
      %v505 = vpack.c.b16 %v413, %v412
      %v506 = vpack.c.b16 %v415, %v414
      %v507 = vpack.c.b16 %v417, %v416
      %v508 = vpack.c.b16 %v419, %v418
      %v509 = vpack.c.b16 %v421, %v420
      %v510 = vpack.c.b16 %v423, %v422
      %v511 = vpack.c.b16 %v425, %v424
      %v512 = vpack.c.b16 %v427, %v426
      %v513 = vpack.c.b16 %v429, %v428
      %v514 = vpack.c.b16 %v431, %v430
      %v515 = vpack.c.b16 %v433, %v432
      %v516 = vpack.c.b16 %v435, %v434
      %v517 = vpack.c.b16 %v437, %v436
      %v518 = vpack.c.b16 %v439, %v438
      %v519 = vpack.c.b16 %v441, %v440
      %v520 = vpack.c.b16 %v443, %v442
      %v521 = vpack.c.b16 %v445, %v444
      %v522 = vpack.c.b16 %v447, %v446
      %v523 = vpack.c.b16 %v449, %v448
      %v524 = vpack.c.b16 %v451, %v450
      %v525 = vpack.c.b16 %v453, %v452
      %v526 = vpack.c.b16 %v455, %v454
      %v527 = vpack.c.b16 %v457, %v456
      %v528 = vpack.c.b16 %v459, %v458
      %v529 = vpack.c.b16 %v461, %v460
      %v530 = vpack.c.b16 %v463, %v462
      %v531 = vpack.c.b16 %v465, %v464
      %v532 = vpack.c.b16 %v467, %v466
      %v533 = vpack.c.b16 %v469, %v468
      %v534 = vpack.c.b16 %v471, %v470
      %v535 = vpack.c.b16 %v473, %v472
      %v536 = vpack.c.b16 %v475, %v474
      %v537 = vpack.c.b16 %v477, %v476
      %v538 = vpack.c.b16 %v479, %v478
      %v539 = vpack.c.b16 %v481, %v480
      %v540 = vpack.c.b16 %v483, %v482
      %v541 = vpack.c.b16 %v485, %v484
      %v542 = vpack.c.b16 %v487, %v486
      %v543 = vpack.c.b16 %v489, %v488
      %v544 = vpack.c.b16 %v491, %v490
      %v545 = vpack.c.b16 %v493, %v492
      %v546 = vpack.c.b16 %v495, %v494
      %v547 = vpack.c.b16 %v497, %v496
      %v548 = vpack.c.b16 %v499, %v498
      %v549 = vpack.c.b16 %v501, %v500
      %v562 = vunpack.c.l.b16 %v298
      %v563 = vunpack.c.l.b16 %v299
      %v564 = vunpack.c.l.b16 %v300
      %v565 = vunpack.c.l.b16 %v301
      %v566 = vunpack.c.l.b16 %v302
      %v567 = vunpack.c.l.b16 %v303
      %v568 = vunpack.c.l.b16 %v304
      %v569 = vunpack.c.l.b16 %v305
      %v570 = vunpack.c.l.b16 %v306
      %v571 = vunpack.c.l.b16 %v307
      %v572 = vunpack.c.l.b16 %v308
      %v573 = vunpack.c.l.b16 %v309
      %v574 = vpack.c.b16 %v563, %v562
      %v575 = vpack.c.b16 %v565, %v564
      %v576 = vpack.c.b16 %v567, %v566
      %v577 = vpack.c.b16 %v569, %v568
      %v578 = vpack.c.b16 %v571, %v570
      %v579 = vpack.c.b16 %v573, %v572
      %vm586 = vcmask 785408
      %v588 = vsel %vm586, %v502, 0
      %v591 = vsel %vm586, %v503, 0
      %v594 = vsel %vm586, %v504, 0
      %v597 = vsel %vm586, %v505, 0
      %v600 = vsel %vm586, %v506, 0
      %v603 = vsel %vm586, %v507, 0
      %v606 = vsel %vm586, %v508, 0
      %v609 = vsel %vm586, %v509, 0
      %v612 = vsel %vm586, %v510, 0
      %v615 = vsel %vm586, %v511, 0
      %v618 = vsel %vm586, %v512, 0
      %v621 = vsel %vm586, %v513, 0
      %v624 = vsel %vm586, %v514, 0
      %v627 = vsel %vm586, %v515, 0
      %v630 = vsel %vm586, %v516, 0
      %v633 = vsel %vm586, %v517, 0
      %v636 = vsel %vm586, %v518, 0
      %v639 = vsel %vm586, %v519, 0
      %v642 = vsel %vm586, %v520, 0
      %v645 = vsel %vm586, %v521, 0
      %v648 = vsel %vm586, %v522, 0
      %v651 = vsel %vm586, %v523, 0
      %v654 = vsel %vm586, %v524, 0
      %v657 = vsel %vm586, %v525, 0
      %v660 = vsel %vm586, %v526, 0
      %v663 = vsel %vm586, %v527, 0
      %v666 = vsel %vm586, %v528, 0
      %v669 = vsel %vm586, %v529, 0
      %v672 = vsel %vm586, %v530, 0
      %v675 = vsel %vm586, %v531, 0
      %v678 = vsel %vm586, %v532, 0
      %v681 = vsel %vm586, %v533, 0
      %v684 = vsel %vm586, %v534, 0
      %v687 = vsel %vm586, %v535, 0
      %v690 = vsel %vm586, %v536, 0
      %v693 = vsel %vm586, %v537, 0
      %v696 = vsel %vm586, %v538, 0
      %v699 = vsel %vm586, %v539, 0
      %v702 = vsel %vm586, %v540, 0
      %v705 = vsel %vm586, %v541, 0
      %v708 = vsel %vm586, %v542, 0
      %v711 = vsel %vm586, %v543, 0
      %v714 = vsel %vm586, %v544, 0
      %v717 = vsel %vm586, %v545, 0
      %v720 = vsel %vm586, %v546, 0
      %v723 = vsel %vm586, %v547, 0
      %v726 = vsel %vm586, %v548, 0
      %v729 = vsel %vm586, %v549, 0
      %731 = vmatprep.subr.bf16.mxu0 0
      %732 = vmatpush1.bf16.msra.mxu0 0
      %733 = vmatprep.subr.bf16.mxu0 0
      %734 = vmatpush1.bf16.msra.mxu0 0
      %735 = vmatprep.subr.bf16.mxu0 0
      %736 = vmatpush1.bf16.msra.mxu0 %v579
      %737 = vmatprep.subr.bf16.mxu0 0
      %738 = vmatpush1.bf16.msra.mxu0 %v578
      %739 = vmatprep.subr.bf16.mxu0 0
      %740 = vmatpush1.bf16.msra.mxu0 %v577
      %741 = vmatprep.subr.bf16.mxu0 0
      %742 = vmatpush1.bf16.msra.mxu0 %v576
      %743 = vmatprep.subr.bf16.mxu0 0
      %744 = vmatpush1.bf16.msra.mxu0 %v575
      %745 = vmatprep.subr.bf16.mxu0 0
      %746 = vmatpush1.bf16.msra.mxu0 %v574
      %747 = vmatprep.subr.bf16.mxu0 0
      %748 = vmatpush2.bf16.msra.mxu0 0
      %749 = vmatprep.subr.bf16.mxu0 0
      %750 = vmatpush2.bf16.msra.mxu0 0
      %751 = vmatprep.subr.bf16.mxu0 0
      %752 = vmatpush2.bf16.msra.mxu0 0
      %753 = vmatprep.subr.bf16.mxu0 0
      %754 = vmatpush2.bf16.msra.mxu0 0
      %755 = vmatprep.subr.bf16.mxu0 0
      %756 = vmatpush2.bf16.msra.mxu0 0
      %757 = vmatprep.subr.bf16.mxu0 0
      %758 = vmatpush2.bf16.msra.mxu0 0
      %759 = vmatprep.subr.bf16.mxu0 0
      %760 = vmatpush2.bf16.msra.mxu0 0
      %761 = vmatprep.subr.bf16.mxu0 0
      %762 = vmatpush2.bf16.msra.mxu0 0
      %763 = vmatprep.mubr.bf16.mxu0 0
      %764 = vmatmul.mubr.bf16.gmra.mxu0 %v588
      %v765 = vpop.f32.mrf.mxu0
      %v766 = vadd.f32 0.0, %v765
      %v767 = vpop.f32.mrf.mxu0
      %v768 = vpop.f32.mrf.mxu0
      %v769 = vadd.f32 0.0, %v768
      %v770 = vpop.f32.mrf.mxu0
      %771 = vmatprep.mubr.bf16.mxu0 0
      %772 = vmatmul.mubr.bf16.gmra.mxu0 %v591
      %v773 = vpop.f32.mrf.mxu0
      %v774 = vadd.f32 0.0, %v773
      %v775 = vpop.f32.mrf.mxu0
      %v776 = vpop.f32.mrf.mxu0
      %v777 = vadd.f32 0.0, %v776
      %v778 = vpop.f32.mrf.mxu0
      %779 = vmatprep.mubr.bf16.mxu0 0
      %780 = vmatmul.mubr.bf16.gmra.mxu0 %v594
      %v781 = vpop.f32.mrf.mxu0
      %v782 = vadd.f32 0.0, %v781
      %v783 = vpop.f32.mrf.mxu0
      %v784 = vpop.f32.mrf.mxu0
      %v785 = vadd.f32 0.0, %v784
      %v786 = vpop.f32.mrf.mxu0
      %787 = vmatprep.mubr.bf16.mxu0 0
      %788 = vmatmul.mubr.bf16.gmra.mxu0 %v597
      %v789 = vpop.f32.mrf.mxu0
      %v790 = vadd.f32 0.0, %v789
      %v791 = vpop.f32.mrf.mxu0
      %v792 = vpop.f32.mrf.mxu0
      %v793 = vadd.f32 0.0, %v792
      %v794 = vpop.f32.mrf.mxu0
      %795 = vmatprep.mubr.bf16.mxu0 0
      %796 = vmatmul.mubr.bf16.gmra.mxu0 %v600
      %v797 = vpop.f32.mrf.mxu0
      %v798 = vadd.f32 0.0, %v797
      %v799 = vpop.f32.mrf.mxu0
      %v800 = vpop.f32.mrf.mxu0
      %v801 = vadd.f32 0.0, %v800
      %v802 = vpop.f32.mrf.mxu0
      %803 = vmatprep.mubr.bf16.mxu0 0
      %804 = vmatmul.mubr.bf16.gmra.mxu0 %v603
      %v805 = vpop.f32.mrf.mxu0
      %v806 = vadd.f32 0.0, %v805
      %v807 = vpop.f32.mrf.mxu0
      %v808 = vpop.f32.mrf.mxu0
      %v809 = vadd.f32 0.0, %v808
      %v810 = vpop.f32.mrf.mxu0
      %811 = vmatprep.mubr.bf16.mxu0 0
      %812 = vmatmul.mubr.bf16.gmra.mxu0 %v606
      %v813 = vpop.f32.mrf.mxu0
      %v814 = vadd.f32 0.0, %v813
      %v815 = vpop.f32.mrf.mxu0
      %v816 = vpop.f32.mrf.mxu0
      %v817 = vadd.f32 0.0, %v816
      %v818 = vpop.f32.mrf.mxu0
      %819 = vmatprep.mubr.bf16.mxu0 0
      %820 = vmatmul.mubr.bf16.gmra.mxu0 %v609
      %v821 = vpop.f32.mrf.mxu0
      %v822 = vadd.f32 0.0, %v821
      %v823 = vpop.f32.mrf.mxu0
      %v824 = vpop.f32.mrf.mxu0
      %v825 = vadd.f32 0.0, %v824
      %v826 = vpop.f32.mrf.mxu0
      %827 = vmatprep.mubr.bf16.mxu0 0
      %828 = vmatmul.mubr.bf16.gmra.mxu0 %v612
      %v829 = vpop.f32.mrf.mxu0
      %v830 = vadd.f32 0.0, %v829
      %v831 = vpop.f32.mrf.mxu0
      %v832 = vpop.f32.mrf.mxu0
      %v833 = vadd.f32 0.0, %v832
      %v834 = vpop.f32.mrf.mxu0
      %835 = vmatprep.mubr.bf16.mxu0 0
      %836 = vmatmul.mubr.bf16.gmra.mxu0 %v615
      %v837 = vpop.f32.mrf.mxu0
      %v838 = vadd.f32 0.0, %v837
      %v839 = vpop.f32.mrf.mxu0
      %v840 = vpop.f32.mrf.mxu0
      %v841 = vadd.f32 0.0, %v840
      %v842 = vpop.f32.mrf.mxu0
      %843 = vmatprep.mubr.bf16.mxu0 0
      %844 = vmatmul.mubr.bf16.gmra.mxu0 %v618
      %v845 = vpop.f32.mrf.mxu0
      %v846 = vadd.f32 0.0, %v845
      %v847 = vpop.f32.mrf.mxu0
      %v848 = vpop.f32.mrf.mxu0
      %v849 = vadd.f32 0.0, %v848
      %v850 = vpop.f32.mrf.mxu0
      %851 = vmatprep.mubr.bf16.mxu0 0
      %852 = vmatmul.mubr.bf16.gmra.mxu0 %v621
      %v853 = vpop.f32.mrf.mxu0
      %v854 = vadd.f32 0.0, %v853
      %v855 = vpop.f32.mrf.mxu0
      %v856 = vpop.f32.mrf.mxu0
      %v857 = vadd.f32 0.0, %v856
      %v858 = vpop.f32.mrf.mxu0
      %859 = vmatprep.mubr.bf16.mxu0 0
      %860 = vmatmul.mubr.bf16.gmra.mxu0 %v624
      %v861 = vpop.f32.mrf.mxu0
      %v862 = vadd.f32 0.0, %v861
      %v863 = vpop.f32.mrf.mxu0
      %v864 = vpop.f32.mrf.mxu0
      %v865 = vadd.f32 0.0, %v864
      %v866 = vpop.f32.mrf.mxu0
      %867 = vmatprep.mubr.bf16.mxu0 0
      %868 = vmatmul.mubr.bf16.gmra.mxu0 %v627
      %v869 = vpop.f32.mrf.mxu0
      %v870 = vadd.f32 0.0, %v869
      %v871 = vpop.f32.mrf.mxu0
      %v872 = vpop.f32.mrf.mxu0
      %v873 = vadd.f32 0.0, %v872
      %v874 = vpop.f32.mrf.mxu0
      %875 = vmatprep.mubr.bf16.mxu0 0
      %876 = vmatmul.mubr.bf16.gmra.mxu0 %v630
      %v877 = vpop.f32.mrf.mxu0
      %v878 = vadd.f32 0.0, %v877
      %v879 = vpop.f32.mrf.mxu0
      %v880 = vpop.f32.mrf.mxu0
      %v881 = vadd.f32 0.0, %v880
      %v882 = vpop.f32.mrf.mxu0
      %883 = vmatprep.mubr.bf16.mxu0 0
      %884 = vmatmul.mubr.bf16.gmra.mxu0 %v633
      %v885 = vpop.f32.mrf.mxu0
      %v886 = vadd.f32 0.0, %v885
      %v887 = vpop.f32.mrf.mxu0
      %v888 = vpop.f32.mrf.mxu0
      %v889 = vadd.f32 0.0, %v888
      %v890 = vpop.f32.mrf.mxu0
      %891 = vmatprep.mubr.bf16.mxu0 0
      %892 = vmatmul.mubr.bf16.gmra.mxu0 %v636
      %v893 = vpop.f32.mrf.mxu0
      %v894 = vadd.f32 0.0, %v893
      %v895 = vpop.f32.mrf.mxu0
      %v896 = vpop.f32.mrf.mxu0
      %v897 = vadd.f32 0.0, %v896
      %v898 = vpop.f32.mrf.mxu0
      %899 = vmatprep.mubr.bf16.mxu0 0
      %900 = vmatmul.mubr.bf16.gmra.mxu0 %v639
      %v901 = vpop.f32.mrf.mxu0
      %v902 = vadd.f32 0.0, %v901
      %v903 = vpop.f32.mrf.mxu0
      %v904 = vpop.f32.mrf.mxu0
      %v905 = vadd.f32 0.0, %v904
      %v906 = vpop.f32.mrf.mxu0
      %907 = vmatprep.mubr.bf16.mxu0 0
      %908 = vmatmul.mubr.bf16.gmra.mxu0 %v642
      %v909 = vpop.f32.mrf.mxu0
      %v910 = vadd.f32 0.0, %v909
      %v911 = vpop.f32.mrf.mxu0
      %v912 = vpop.f32.mrf.mxu0
      %v913 = vadd.f32 0.0, %v912
      %v914 = vpop.f32.mrf.mxu0
      %915 = vmatprep.mubr.bf16.mxu0 0
      %916 = vmatmul.mubr.bf16.gmra.mxu0 %v645
      %v917 = vpop.f32.mrf.mxu0
      %v918 = vadd.f32 0.0, %v917
      %v919 = vpop.f32.mrf.mxu0
      %v920 = vpop.f32.mrf.mxu0
      %v921 = vadd.f32 0.0, %v920
      %v922 = vpop.f32.mrf.mxu0
      %923 = vmatprep.mubr.bf16.mxu0 0
      %924 = vmatmul.mubr.bf16.gmra.mxu0 %v648
      %v925 = vpop.f32.mrf.mxu0
      %v926 = vadd.f32 0.0, %v925
      %v927 = vpop.f32.mrf.mxu0
      %v928 = vpop.f32.mrf.mxu0
      %v929 = vadd.f32 0.0, %v928
      %v930 = vpop.f32.mrf.mxu0
      %931 = vmatprep.mubr.bf16.mxu0 0
      %932 = vmatmul.mubr.bf16.gmra.mxu0 %v651
      %v933 = vpop.f32.mrf.mxu0
      %v934 = vadd.f32 0.0, %v933
      %v935 = vpop.f32.mrf.mxu0
      %v936 = vpop.f32.mrf.mxu0
      %v937 = vadd.f32 0.0, %v936
      %v938 = vpop.f32.mrf.mxu0
      %939 = vmatprep.mubr.bf16.mxu0 0
      %940 = vmatmul.mubr.bf16.gmra.mxu0 %v654
      %v941 = vpop.f32.mrf.mxu0
      %v942 = vadd.f32 0.0, %v941
      %v943 = vpop.f32.mrf.mxu0
      %v944 = vpop.f32.mrf.mxu0
      %v945 = vadd.f32 0.0, %v944
      %v946 = vpop.f32.mrf.mxu0
      %947 = vmatprep.mubr.bf16.mxu0 0
      %948 = vmatmul.mubr.bf16.gmra.mxu0 %v657
      %v949 = vpop.f32.mrf.mxu0
      %v950 = vadd.f32 0.0, %v949
      %v951 = vpop.f32.mrf.mxu0
      %v952 = vpop.f32.mrf.mxu0
      %v953 = vadd.f32 0.0, %v952
      %v954 = vpop.f32.mrf.mxu0
      %955 = vmatprep.mubr.bf16.mxu0 0
      %956 = vmatmul.mubr.bf16.gmra.mxu0 %v660
      %v957 = vpop.f32.mrf.mxu0
      %v958 = vadd.f32 0.0, %v957
      %v959 = vpop.f32.mrf.mxu0
      %v960 = vpop.f32.mrf.mxu0
      %v961 = vadd.f32 0.0, %v960
      %v962 = vpop.f32.mrf.mxu0
      %963 = vmatprep.mubr.bf16.mxu0 0
      %964 = vmatmul.mubr.bf16.gmra.mxu0 %v663
      %v965 = vpop.f32.mrf.mxu0
      %v966 = vadd.f32 0.0, %v965
      %v967 = vpop.f32.mrf.mxu0
      %v968 = vpop.f32.mrf.mxu0
      %v969 = vadd.f32 0.0, %v968
      %v970 = vpop.f32.mrf.mxu0
      %971 = vmatprep.mubr.bf16.mxu0 0
      %972 = vmatmul.mubr.bf16.gmra.mxu0 %v666
      %v973 = vpop.f32.mrf.mxu0
      %v974 = vadd.f32 0.0, %v973
      %v975 = vpop.f32.mrf.mxu0
      %v976 = vpop.f32.mrf.mxu0
      %v977 = vadd.f32 0.0, %v976
      %v978 = vpop.f32.mrf.mxu0
      %979 = vmatprep.mubr.bf16.mxu0 0
      %980 = vmatmul.mubr.bf16.gmra.mxu0 %v669
      %v981 = vpop.f32.mrf.mxu0
      %v982 = vadd.f32 0.0, %v981
      %v983 = vpop.f32.mrf.mxu0
      %v984 = vpop.f32.mrf.mxu0
      %v985 = vadd.f32 0.0, %v984
      %v986 = vpop.f32.mrf.mxu0
      %987 = vmatprep.mubr.bf16.mxu0 0
      %988 = vmatmul.mubr.bf16.gmra.mxu0 %v672
      %v989 = vpop.f32.mrf.mxu0
      %v990 = vadd.f32 0.0, %v989
      %v991 = vpop.f32.mrf.mxu0
      %v992 = vpop.f32.mrf.mxu0
      %v993 = vadd.f32 0.0, %v992
      %v994 = vpop.f32.mrf.mxu0
      %995 = vmatprep.mubr.bf16.mxu0 0
      %996 = vmatmul.mubr.bf16.gmra.mxu0 %v675
      %v997 = vpop.f32.mrf.mxu0
      %v998 = vadd.f32 0.0, %v997
      %v999 = vpop.f32.mrf.mxu0
      %v1000 = vpop.f32.mrf.mxu0
      %v1001 = vadd.f32 0.0, %v1000
      %v1002 = vpop.f32.mrf.mxu0
      %1003 = vmatprep.mubr.bf16.mxu0 0
      %1004 = vmatmul.mubr.bf16.gmra.mxu0 %v678
      %v1005 = vpop.f32.mrf.mxu0
      %v1006 = vadd.f32 0.0, %v1005
      %v1007 = vpop.f32.mrf.mxu0
      %v1008 = vpop.f32.mrf.mxu0
      %v1009 = vadd.f32 0.0, %v1008
      %v1010 = vpop.f32.mrf.mxu0
      %1011 = vmatprep.mubr.bf16.mxu0 0
      %1012 = vmatmul.mubr.bf16.gmra.mxu0 %v681
      %v1013 = vpop.f32.mrf.mxu0
      %v1014 = vadd.f32 0.0, %v1013
      %v1015 = vpop.f32.mrf.mxu0
      %v1016 = vpop.f32.mrf.mxu0
      %v1017 = vadd.f32 0.0, %v1016
      %v1018 = vpop.f32.mrf.mxu0
      %1019 = vmatprep.mubr.bf16.mxu0 0
      %1020 = vmatmul.mubr.bf16.gmra.mxu0 %v684
      %v1021 = vpop.f32.mrf.mxu0
      %v1022 = vadd.f32 0.0, %v1021
      %v1023 = vpop.f32.mrf.mxu0
      %v1024 = vpop.f32.mrf.mxu0
      %v1025 = vadd.f32 0.0, %v1024
      %v1026 = vpop.f32.mrf.mxu0
      %1027 = vmatprep.mubr.bf16.mxu0 0
      %1028 = vmatmul.mubr.bf16.gmra.mxu0 %v687
      %v1029 = vpop.f32.mrf.mxu0
      %v1030 = vadd.f32 0.0, %v1029
      %v1031 = vpop.f32.mrf.mxu0
      %v1032 = vpop.f32.mrf.mxu0
      %v1033 = vadd.f32 0.0, %v1032
      %v1034 = vpop.f32.mrf.mxu0
      %1035 = vmatprep.mubr.bf16.mxu0 0
      %1036 = vmatmul.mubr.bf16.gmra.mxu0 %v690
      %v1037 = vpop.f32.mrf.mxu0
      %v1038 = vadd.f32 0.0, %v1037
      %v1039 = vpop.f32.mrf.mxu0
      %v1040 = vpop.f32.mrf.mxu0
      %v1041 = vadd.f32 0.0, %v1040
      %v1042 = vpop.f32.mrf.mxu0
      %1043 = vmatprep.mubr.bf16.mxu0 0
      %1044 = vmatmul.mubr.bf16.gmra.mxu0 %v693
      %v1045 = vpop.f32.mrf.mxu0
      %v1046 = vadd.f32 0.0, %v1045
      %v1047 = vpop.f32.mrf.mxu0
      %v1048 = vpop.f32.mrf.mxu0
      %v1049 = vadd.f32 0.0, %v1048
      %v1050 = vpop.f32.mrf.mxu0
      %1051 = vmatprep.mubr.bf16.mxu0 0
      %1052 = vmatmul.mubr.bf16.gmra.mxu0 %v696
      %v1053 = vpop.f32.mrf.mxu0
      %v1054 = vadd.f32 0.0, %v1053
      %v1055 = vpop.f32.mrf.mxu0
      %v1056 = vpop.f32.mrf.mxu0
      %v1057 = vadd.f32 0.0, %v1056
      %v1058 = vpop.f32.mrf.mxu0
      %1059 = vmatprep.mubr.bf16.mxu0 0
      %1060 = vmatmul.mubr.bf16.gmra.mxu0 %v699
      %v1061 = vpop.f32.mrf.mxu0
      %v1062 = vadd.f32 0.0, %v1061
      %v1063 = vpop.f32.mrf.mxu0
      %v1064 = vpop.f32.mrf.mxu0
      %v1065 = vadd.f32 0.0, %v1064
      %v1066 = vpop.f32.mrf.mxu0
      %1067 = vmatprep.mubr.bf16.mxu0 0
      %1068 = vmatmul.mubr.bf16.gmra.mxu0 %v702
      %v1069 = vpop.f32.mrf.mxu0
      %v1070 = vadd.f32 0.0, %v1069
      %v1071 = vpop.f32.mrf.mxu0
      %v1072 = vpop.f32.mrf.mxu0
      %v1073 = vadd.f32 0.0, %v1072
      %v1074 = vpop.f32.mrf.mxu0
      %1075 = vmatprep.mubr.bf16.mxu0 0
      %1076 = vmatmul.mubr.bf16.gmra.mxu0 %v705
      %v1077 = vpop.f32.mrf.mxu0
      %v1078 = vadd.f32 0.0, %v1077
      %v1079 = vpop.f32.mrf.mxu0
      %v1080 = vpop.f32.mrf.mxu0
      %v1081 = vadd.f32 0.0, %v1080
      %v1082 = vpop.f32.mrf.mxu0
      %1083 = vmatprep.mubr.bf16.mxu0 0
      %1084 = vmatmul.mubr.bf16.gmra.mxu0 %v708
      %v1085 = vpop.f32.mrf.mxu0
      %v1086 = vadd.f32 0.0, %v1085
      %v1087 = vpop.f32.mrf.mxu0
      %v1088 = vpop.f32.mrf.mxu0
      %v1089 = vadd.f32 0.0, %v1088
      %v1090 = vpop.f32.mrf.mxu0
      %1091 = vmatprep.mubr.bf16.mxu0 0
      %1092 = vmatmul.mubr.bf16.gmra.mxu0 %v711
      %v1093 = vpop.f32.mrf.mxu0
      %v1094 = vadd.f32 0.0, %v1093
      %v1095 = vpop.f32.mrf.mxu0
      %v1096 = vpop.f32.mrf.mxu0
      %v1097 = vadd.f32 0.0, %v1096
      %v1098 = vpop.f32.mrf.mxu0
      %1099 = vmatprep.mubr.bf16.mxu0 0
      %1100 = vmatmul.mubr.bf16.gmra.mxu0 %v714
      %v1101 = vpop.f32.mrf.mxu0
      %v1102 = vadd.f32 0.0, %v1101
      %v1103 = vpop.f32.mrf.mxu0
      %v1104 = vpop.f32.mrf.mxu0
      %v1105 = vadd.f32 0.0, %v1104
      %v1106 = vpop.f32.mrf.mxu0
      %1107 = vmatprep.mubr.bf16.mxu0 0
      %1108 = vmatmul.mubr.bf16.gmra.mxu0 %v717
      %v1109 = vpop.f32.mrf.mxu0
      %v1110 = vadd.f32 0.0, %v1109
      %v1111 = vpop.f32.mrf.mxu0
      %v1112 = vpop.f32.mrf.mxu0
      %v1113 = vadd.f32 0.0, %v1112
      %v1114 = vpop.f32.mrf.mxu0
      %1115 = vmatprep.mubr.bf16.mxu0 0
      %1116 = vmatmul.mubr.bf16.gmra.mxu0 %v720
      %v1117 = vpop.f32.mrf.mxu0
      %v1118 = vadd.f32 0.0, %v1117
      %v1119 = vpop.f32.mrf.mxu0
      %v1120 = vpop.f32.mrf.mxu0
      %v1121 = vadd.f32 0.0, %v1120
      %v1122 = vpop.f32.mrf.mxu0
      %1123 = vmatprep.mubr.bf16.mxu0 0
      %1124 = vmatmul.mubr.bf16.gmra.mxu0 %v723
      %v1125 = vpop.f32.mrf.mxu0
      %v1126 = vadd.f32 0.0, %v1125
      %v1127 = vpop.f32.mrf.mxu0
      %v1128 = vpop.f32.mrf.mxu0
      %v1129 = vadd.f32 0.0, %v1128
      %v1130 = vpop.f32.mrf.mxu0
      %1131 = vmatprep.mubr.bf16.mxu0 0
      %1132 = vmatmul.mubr.bf16.gmra.mxu0 %v726
      %v1133 = vpop.f32.mrf.mxu0
      %v1134 = vadd.f32 0.0, %v1133
      %v1135 = vpop.f32.mrf.mxu0
      %v1136 = vpop.f32.mrf.mxu0
      %v1137 = vadd.f32 0.0, %v1136
      %v1138 = vpop.f32.mrf.mxu0
      %1139 = vmatprep.mubr.bf16.mxu0 0
      %1140 = vmatmul.mubr.bf16.gmra.mxu0 %v729
      %v1141 = vpop.f32.mrf.mxu0
      %v1142 = vadd.f32 0.0, %v1141
      %v1143 = vpop.f32.mrf.mxu0
      %v1144 = vpop.f32.mrf.mxu0
      %v1145 = vadd.f32 0.0, %v1144
      %v1146 = vpop.f32.mrf.mxu0
      %1147 = vdwg.mxu0
      %v1148 = vld [vmem:[%s2] sm:$0x1]
      %v1150 = vlaneseq
      %v1151 = vshrl.u32 %v1150, 7
      %v1152 = vsub.s32 0, %v1151
      %v1153 = vrot.slane %v1148, %v1152
      %v1155 = vmul.f32 %v766, %v1153
      %v1156 = vmul.f32 %v769, %v1153
      %v1157 = vmul.f32 %v774, %v1153
      %v1158 = vmul.f32 %v777, %v1153
      %v1159 = vmul.f32 %v782, %v1153
      %v1160 = vmul.f32 %v785, %v1153
      %v1161 = vmul.f32 %v790, %v1153
      %v1162 = vmul.f32 %v793, %v1153
      %v1163 = vmul.f32 %v798, %v1153
      %v1164 = vmul.f32 %v801, %v1153
      %v1165 = vmul.f32 %v806, %v1153
      %v1166 = vmul.f32 %v809, %v1153
      %v1167 = vmul.f32 %v814, %v1153
      %v1168 = vmul.f32 %v817, %v1153
      %v1169 = vmul.f32 %v822, %v1153
      %v1170 = vmul.f32 %v825, %v1153
      %v1171 = vmul.f32 %v830, %v1153
      %v1172 = vmul.f32 %v833, %v1153
      %v1173 = vmul.f32 %v838, %v1153
      %v1174 = vmul.f32 %v841, %v1153
      %v1175 = vmul.f32 %v846, %v1153
      %v1176 = vmul.f32 %v849, %v1153
      %v1177 = vmul.f32 %v854, %v1153
      %v1178 = vmul.f32 %v857, %v1153
      %v1179 = vmul.f32 %v862, %v1153
      %v1180 = vmul.f32 %v865, %v1153
      %v1181 = vmul.f32 %v870, %v1153
      %v1182 = vmul.f32 %v873, %v1153
      %v1183 = vmul.f32 %v878, %v1153
      %v1184 = vmul.f32 %v881, %v1153
      %v1185 = vmul.f32 %v886, %v1153
      %v1186 = vmul.f32 %v889, %v1153
      %v1187 = vmul.f32 %v894, %v1153
      %v1188 = vmul.f32 %v897, %v1153
      %v1189 = vmul.f32 %v902, %v1153
      %v1190 = vmul.f32 %v905, %v1153
      %v1191 = vmul.f32 %v910, %v1153
      %v1192 = vmul.f32 %v913, %v1153
      %v1193 = vmul.f32 %v918, %v1153
      %v1194 = vmul.f32 %v921, %v1153
      %v1195 = vmul.f32 %v926, %v1153
      %v1196 = vmul.f32 %v929, %v1153
      %v1197 = vmul.f32 %v934, %v1153
      %v1198 = vmul.f32 %v937, %v1153
      %v1199 = vmul.f32 %v942, %v1153
      %v1200 = vmul.f32 %v945, %v1153
      %v1201 = vmul.f32 %v950, %v1153
      %v1202 = vmul.f32 %v953, %v1153
      %v1203 = vmul.f32 %v958, %v1153
      %v1204 = vmul.f32 %v961, %v1153
      %v1205 = vmul.f32 %v966, %v1153
      %v1206 = vmul.f32 %v969, %v1153
      %v1207 = vmul.f32 %v974, %v1153
      %v1208 = vmul.f32 %v977, %v1153
      %v1209 = vmul.f32 %v982, %v1153
      %v1210 = vmul.f32 %v985, %v1153
      %v1211 = vmul.f32 %v990, %v1153
      %v1212 = vmul.f32 %v993, %v1153
      %v1213 = vmul.f32 %v998, %v1153
      %v1214 = vmul.f32 %v1001, %v1153
      %v1215 = vmul.f32 %v1006, %v1153
      %v1216 = vmul.f32 %v1009, %v1153
      %v1217 = vmul.f32 %v1014, %v1153
      %v1218 = vmul.f32 %v1017, %v1153
      %v1219 = vmul.f32 %v1022, %v1153
      %v1220 = vmul.f32 %v1025, %v1153
      %v1221 = vmul.f32 %v1030, %v1153
      %v1222 = vmul.f32 %v1033, %v1153
      %v1223 = vmul.f32 %v1038, %v1153
      %v1224 = vmul.f32 %v1041, %v1153
      %v1225 = vmul.f32 %v1046, %v1153
      %v1226 = vmul.f32 %v1049, %v1153
      %v1227 = vmul.f32 %v1054, %v1153
      %v1228 = vmul.f32 %v1057, %v1153
      %v1229 = vmul.f32 %v1062, %v1153
      %v1230 = vmul.f32 %v1065, %v1153
      %v1231 = vmul.f32 %v1070, %v1153
      %v1232 = vmul.f32 %v1073, %v1153
      %v1233 = vmul.f32 %v1078, %v1153
      %v1234 = vmul.f32 %v1081, %v1153
      %v1235 = vmul.f32 %v1086, %v1153
      %v1236 = vmul.f32 %v1089, %v1153
      %v1237 = vmul.f32 %v1094, %v1153
      %v1238 = vmul.f32 %v1097, %v1153
      %v1239 = vmul.f32 %v1102, %v1153
      %v1240 = vmul.f32 %v1105, %v1153
      %v1241 = vmul.f32 %v1110, %v1153
      %v1242 = vmul.f32 %v1113, %v1153
      %v1243 = vmul.f32 %v1118, %v1153
      %v1244 = vmul.f32 %v1121, %v1153
      %v1245 = vmul.f32 %v1126, %v1153
      %v1246 = vmul.f32 %v1129, %v1153
      %v1247 = vmul.f32 %v1134, %v1153
      %v1248 = vmul.f32 %v1137, %v1153
      %v1249 = vmul.f32 %v1142, %v1153
      %v1250 = vmul.f32 %v1145, %v1153
      %v1251 = vld [vmem:[%s3] sm:$0x1]
      %v1253 = vlaneseq
      %v1254 = vshrl.u32 %v1253, 7
      %v1255 = vsub.s32 0, %v1254
      %v1256 = vrot.slane %v1251, %v1255
      %v1258 = vadd.f32 %v1155, %v1256
      %v1259 = vadd.f32 %v1156, %v1256
      %v1260 = vadd.f32 %v1157, %v1256
      %v1261 = vadd.f32 %v1158, %v1256
      %v1262 = vadd.f32 %v1159, %v1256
      %v1263 = vadd.f32 %v1160, %v1256
      %v1264 = vadd.f32 %v1161, %v1256
      %v1265 = vadd.f32 %v1162, %v1256
      %v1266 = vadd.f32 %v1163, %v1256
      %v1267 = vadd.f32 %v1164, %v1256
      %v1268 = vadd.f32 %v1165, %v1256
      %v1269 = vadd.f32 %v1166, %v1256
      %v1270 = vadd.f32 %v1167, %v1256
      %v1271 = vadd.f32 %v1168, %v1256
      %v1272 = vadd.f32 %v1169, %v1256
      %v1273 = vadd.f32 %v1170, %v1256
      %v1274 = vadd.f32 %v1171, %v1256
      %v1275 = vadd.f32 %v1172, %v1256
      %v1276 = vadd.f32 %v1173, %v1256
      %v1277 = vadd.f32 %v1174, %v1256
      %v1278 = vadd.f32 %v1175, %v1256
      %v1279 = vadd.f32 %v1176, %v1256
      %v1280 = vadd.f32 %v1177, %v1256
      %v1281 = vadd.f32 %v1178, %v1256
      %v1282 = vadd.f32 %v1179, %v1256
      %v1283 = vadd.f32 %v1180, %v1256
      %v1284 = vadd.f32 %v1181, %v1256
      %v1285 = vadd.f32 %v1182, %v1256
      %v1286 = vadd.f32 %v1183, %v1256
      %v1287 = vadd.f32 %v1184, %v1256
      %v1288 = vadd.f32 %v1185, %v1256
      %v1289 = vadd.f32 %v1186, %v1256
      %v1290 = vadd.f32 %v1187, %v1256
      %v1291 = vadd.f32 %v1188, %v1256
      %v1292 = vadd.f32 %v1189, %v1256
      %v1293 = vadd.f32 %v1190, %v1256
      %v1294 = vadd.f32 %v1191, %v1256
      %v1295 = vadd.f32 %v1192, %v1256
      %v1296 = vadd.f32 %v1193, %v1256
      %v1297 = vadd.f32 %v1194, %v1256
      %v1298 = vadd.f32 %v1195, %v1256
      %v1299 = vadd.f32 %v1196, %v1256
      %v1300 = vadd.f32 %v1197, %v1256
      %v1301 = vadd.f32 %v1198, %v1256
      %v1302 = vadd.f32 %v1199, %v1256
      %v1303 = vadd.f32 %v1200, %v1256
      %v1304 = vadd.f32 %v1201, %v1256
      %v1305 = vadd.f32 %v1202, %v1256
      %v1306 = vadd.f32 %v1203, %v1256
      %v1307 = vadd.f32 %v1204, %v1256
      %v1308 = vadd.f32 %v1205, %v1256
      %v1309 = vadd.f32 %v1206, %v1256
      %v1310 = vadd.f32 %v1207, %v1256
      %v1311 = vadd.f32 %v1208, %v1256
      %v1312 = vadd.f32 %v1209, %v1256
      %v1313 = vadd.f32 %v1210, %v1256
      %v1314 = vadd.f32 %v1211, %v1256
      %v1315 = vadd.f32 %v1212, %v1256
      %v1316 = vadd.f32 %v1213, %v1256
      %v1317 = vadd.f32 %v1214, %v1256
      %v1318 = vadd.f32 %v1215, %v1256
      %v1319 = vadd.f32 %v1216, %v1256
      %v1320 = vadd.f32 %v1217, %v1256
      %v1321 = vadd.f32 %v1218, %v1256
      %v1322 = vadd.f32 %v1219, %v1256
      %v1323 = vadd.f32 %v1220, %v1256
      %v1324 = vadd.f32 %v1221, %v1256
      %v1325 = vadd.f32 %v1222, %v1256
      %v1326 = vadd.f32 %v1223, %v1256
      %v1327 = vadd.f32 %v1224, %v1256
      %v1328 = vadd.f32 %v1225, %v1256
      %v1329 = vadd.f32 %v1226, %v1256
      %v1330 = vadd.f32 %v1227, %v1256
      %v1331 = vadd.f32 %v1228, %v1256
      %v1332 = vadd.f32 %v1229, %v1256
      %v1333 = vadd.f32 %v1230, %v1256
      %v1334 = vadd.f32 %v1231, %v1256
      %v1335 = vadd.f32 %v1232, %v1256
      %v1336 = vadd.f32 %v1233, %v1256
      %v1337 = vadd.f32 %v1234, %v1256
      %v1338 = vadd.f32 %v1235, %v1256
      %v1339 = vadd.f32 %v1236, %v1256
      %v1340 = vadd.f32 %v1237, %v1256
      %v1341 = vadd.f32 %v1238, %v1256
      %v1342 = vadd.f32 %v1239, %v1256
      %v1343 = vadd.f32 %v1240, %v1256
      %v1344 = vadd.f32 %v1241, %v1256
      %v1345 = vadd.f32 %v1242, %v1256
      %v1346 = vadd.f32 %v1243, %v1256
      %v1347 = vadd.f32 %v1244, %v1256
      %v1348 = vadd.f32 %v1245, %v1256
      %v1349 = vadd.f32 %v1246, %v1256
      %v1350 = vadd.f32 %v1247, %v1256
      %v1351 = vadd.f32 %v1248, %v1256
      %v1352 = vadd.f32 %v1249, %v1256
      %v1353 = vadd.f32 %v1250, %v1256
      %v1354 = vmax.f32 %v1258, 0.0
      %v1355 = vmax.f32 %v1259, 0.0
      %v1356 = vmax.f32 %v1260, 0.0
      %v1357 = vmax.f32 %v1261, 0.0
      %v1358 = vmax.f32 %v1262, 0.0
      %v1359 = vmax.f32 %v1263, 0.0
      %v1360 = vmax.f32 %v1264, 0.0
      %v1361 = vmax.f32 %v1265, 0.0
      %v1362 = vmax.f32 %v1266, 0.0
      %v1363 = vmax.f32 %v1267, 0.0
      %v1364 = vmax.f32 %v1268, 0.0
      %v1365 = vmax.f32 %v1269, 0.0
      %v1366 = vmax.f32 %v1270, 0.0
      %v1367 = vmax.f32 %v1271, 0.0
      %v1368 = vmax.f32 %v1272, 0.0
      %v1369 = vmax.f32 %v1273, 0.0
      %v1370 = vmax.f32 %v1274, 0.0
      %v1371 = vmax.f32 %v1275, 0.0
      %v1372 = vmax.f32 %v1276, 0.0
      %v1373 = vmax.f32 %v1277, 0.0
      %v1374 = vmax.f32 %v1278, 0.0
      %v1375 = vmax.f32 %v1279, 0.0
      %v1376 = vmax.f32 %v1280, 0.0
      %v1377 = vmax.f32 %v1281, 0.0
      %v1378 = vmax.f32 %v1282, 0.0
      %v1379 = vmax.f32 %v1283, 0.0
      %v1380 = vmax.f32 %v1284, 0.0
      %v1381 = vmax.f32 %v1285, 0.0
      %v1382 = vmax.f32 %v1286, 0.0
      %v1383 = vmax.f32 %v1287, 0.0
      %v1384 = vmax.f32 %v1288, 0.0
      %v1385 = vmax.f32 %v1289, 0.0
      %v1386 = vmax.f32 %v1290, 0.0
      %v1387 = vmax.f32 %v1291, 0.0
      %v1388 = vmax.f32 %v1292, 0.0
      %v1389 = vmax.f32 %v1293, 0.0
      %v1390 = vmax.f32 %v1294, 0.0
      %v1391 = vmax.f32 %v1295, 0.0
      %v1392 = vmax.f32 %v1296, 0.0
      %v1393 = vmax.f32 %v1297, 0.0
      %v1394 = vmax.f32 %v1298, 0.0
      %v1395 = vmax.f32 %v1299, 0.0
      %v1396 = vmax.f32 %v1300, 0.0
      %v1397 = vmax.f32 %v1301, 0.0
      %v1398 = vmax.f32 %v1302, 0.0
      %v1399 = vmax.f32 %v1303, 0.0
      %v1400 = vmax.f32 %v1304, 0.0
      %v1401 = vmax.f32 %v1305, 0.0
      %v1402 = vmax.f32 %v1306, 0.0
      %v1403 = vmax.f32 %v1307, 0.0
      %v1404 = vmax.f32 %v1308, 0.0
      %v1405 = vmax.f32 %v1309, 0.0
      %v1406 = vmax.f32 %v1310, 0.0
      %v1407 = vmax.f32 %v1311, 0.0
      %v1408 = vmax.f32 %v1312, 0.0
      %v1409 = vmax.f32 %v1313, 0.0
      %v1410 = vmax.f32 %v1314, 0.0
      %v1411 = vmax.f32 %v1315, 0.0
      %v1412 = vmax.f32 %v1316, 0.0
      %v1413 = vmax.f32 %v1317, 0.0
      %v1414 = vmax.f32 %v1318, 0.0
      %v1415 = vmax.f32 %v1319, 0.0
      %v1416 = vmax.f32 %v1320, 0.0
      %v1417 = vmax.f32 %v1321, 0.0
      %v1418 = vmax.f32 %v1322, 0.0
      %v1419 = vmax.f32 %v1323, 0.0
      %v1420 = vmax.f32 %v1324, 0.0
      %v1421 = vmax.f32 %v1325, 0.0
      %v1422 = vmax.f32 %v1326, 0.0
      %v1423 = vmax.f32 %v1327, 0.0
      %v1424 = vmax.f32 %v1328, 0.0
      %v1425 = vmax.f32 %v1329, 0.0
      %v1426 = vmax.f32 %v1330, 0.0
      %v1427 = vmax.f32 %v1331, 0.0
      %v1428 = vmax.f32 %v1332, 0.0
      %v1429 = vmax.f32 %v1333, 0.0
      %v1430 = vmax.f32 %v1334, 0.0
      %v1431 = vmax.f32 %v1335, 0.0
      %v1432 = vmax.f32 %v1336, 0.0
      %v1433 = vmax.f32 %v1337, 0.0
      %v1434 = vmax.f32 %v1338, 0.0
      %v1435 = vmax.f32 %v1339, 0.0
      %v1436 = vmax.f32 %v1340, 0.0
      %v1437 = vmax.f32 %v1341, 0.0
      %v1438 = vmax.f32 %v1342, 0.0
      %v1439 = vmax.f32 %v1343, 0.0
      %v1440 = vmax.f32 %v1344, 0.0
      %v1441 = vmax.f32 %v1345, 0.0
      %v1442 = vmax.f32 %v1346, 0.0
      %v1443 = vmax.f32 %v1347, 0.0
      %v1444 = vmax.f32 %v1348, 0.0
      %v1445 = vmax.f32 %v1349, 0.0
      %v1446 = vmax.f32 %v1350, 0.0
      %v1447 = vmax.f32 %v1351, 0.0
      %v1448 = vmax.f32 %v1352, 0.0
      %v1449 = vmax.f32 %v1353, 0.0
      %vm1450 = vcmask 654336
      %1451 = vst.msk [vmem:[%s199] sm:$0xff] %vm1450, %v1354
      %1452 = vst.msk [vmem:[%s199 + $0x8] sm:$0xff] %vm1450, %v1355
      %1453 = vst.msk [vmem:[%s199 + $0x10] sm:$0xff] %vm1450, %v1356
      %1454 = vst.msk [vmem:[%s199 + $0x18] sm:$0xff] %vm1450, %v1357
      %1455 = vst.msk [vmem:[%s199 + $0x20] sm:$0xff] %vm1450, %v1358
      %1456 = vst.msk [vmem:[%s199 + $0x28] sm:$0xff] %vm1450, %v1359
      %1457 = vst.msk [vmem:[%s199 + $0x30] sm:$0xff] %vm1450, %v1360
      %1458 = vst.msk [vmem:[%s199 + $0x38] sm:$0xff] %vm1450, %v1361
      %1459 = vst.msk [vmem:[%s199 + $0x40] sm:$0xff] %vm1450, %v1362
      %1460 = vst.msk [vmem:[%s199 + $0x48] sm:$0xff] %vm1450, %v1363
      %1461 = vst.msk [vmem:[%s199 + $0x50] sm:$0xff] %vm1450, %v1364
      %1462 = vst.msk [vmem:[%s199 + $0x58] sm:$0xff] %vm1450, %v1365
      %1463 = vst.msk [vmem:[%s199 + $0x60] sm:$0xff] %vm1450, %v1366
      %1464 = vst.msk [vmem:[%s199 + $0x68] sm:$0xff] %vm1450, %v1367
      %1465 = vst.msk [vmem:[%s199 + $0x70] sm:$0xff] %vm1450, %v1368
      %1466 = vst.msk [vmem:[%s199 + $0x78] sm:$0xff] %vm1450, %v1369
      %1467 = vst.msk [vmem:[%s199 + $0x80] sm:$0xff] %vm1450, %v1370
      %1468 = vst.msk [vmem:[%s199 + $0x88] sm:$0xff] %vm1450, %v1371
      %1469 = vst.msk [vmem:[%s199 + $0x90] sm:$0xff] %vm1450, %v1372
      %1470 = vst.msk [vmem:[%s199 + $0x98] sm:$0xff] %vm1450, %v1373
      %1471 = vst.msk [vmem:[%s199 + $0xa0] sm:$0xff] %vm1450, %v1374
      %1472 = vst.msk [vmem:[%s199 + $0xa8] sm:$0xff] %vm1450, %v1375
      %1473 = vst.msk [vmem:[%s199 + $0xb0] sm:$0xff] %vm1450, %v1376
      %1474 = vst.msk [vmem:[%s199 + $0xb8] sm:$0xff] %vm1450, %v1377
      %1475 = vst.msk [vmem:[%s199 + $0xc0] sm:$0xff] %vm1450, %v1378
      %1476 = vst.msk [vmem:[%s199 + $0xc8] sm:$0xff] %vm1450, %v1379
      %1477 = vst.msk [vmem:[%s199 + $0xd0] sm:$0xff] %vm1450, %v1380
      %1478 = vst.msk [vmem:[%s199 + $0xd8] sm:$0xff] %vm1450, %v1381
      %1479 = vst.msk [vmem:[%s199 + $0xe0] sm:$0xff] %vm1450, %v1382
      %1480 = vst.msk [vmem:[%s199 + $0xe8] sm:$0xff] %vm1450, %v1383
      %1481 = vst.msk [vmem:[%s199 + $0xf0] sm:$0xff] %vm1450, %v1384
      %1482 = vst.msk [vmem:[%s199 + $0xf8] sm:$0xff] %vm1450, %v1385
      %1483 = vst.msk [vmem:[%s199 + $0x100] sm:$0xff] %vm1450, %v1386
      %1484 = vst.msk [vmem:[%s199 + $0x108] sm:$0xff] %vm1450, %v1387
      %1485 = vst.msk [vmem:[%s199 + $0x110] sm:$0xff] %vm1450, %v1388
      %1486 = vst.msk [vmem:[%s199 + $0x118] sm:$0xff] %vm1450, %v1389
      %1487 = vst.msk [vmem:[%s199 + $0x120] sm:$0xff] %vm1450, %v1390
      %1488 = vst.msk [vmem:[%s199 + $0x128] sm:$0xff] %vm1450, %v1391
      %1489 = vst.msk [vmem:[%s199 + $0x130] sm:$0xff] %vm1450, %v1392
      %1490 = vst.msk [vmem:[%s199 + $0x138] sm:$0xff] %vm1450, %v1393
      %1491 = vst.msk [vmem:[%s199 + $0x140] sm:$0xff] %vm1450, %v1394
      %1492 = vst.msk [vmem:[%s199 + $0x148] sm:$0xff] %vm1450, %v1395
      %1493 = vst.msk [vmem:[%s199 + $0x150] sm:$0xff] %vm1450, %v1396
      %1494 = vst.msk [vmem:[%s199 + $0x158] sm:$0xff] %vm1450, %v1397
      %1495 = vst.msk [vmem:[%s199 + $0x160] sm:$0xff] %vm1450, %v1398
      %1496 = vst.msk [vmem:[%s199 + $0x168] sm:$0xff] %vm1450, %v1399
      %1497 = vst.msk [vmem:[%s199 + $0x170] sm:$0xff] %vm1450, %v1400
      %1498 = vst.msk [vmem:[%s199 + $0x178] sm:$0xff] %vm1450, %v1401
      %1499 = vst.msk [vmem:[%s199 + $0x180] sm:$0xff] %vm1450, %v1402
      %1500 = vst.msk [vmem:[%s199 + $0x188] sm:$0xff] %vm1450, %v1403
      %1501 = vst.msk [vmem:[%s199 + $0x190] sm:$0xff] %vm1450, %v1404
      %1502 = vst.msk [vmem:[%s199 + $0x198] sm:$0xff] %vm1450, %v1405
      %1503 = vst.msk [vmem:[%s199 + $0x1a0] sm:$0xff] %vm1450, %v1406
      %1504 = vst.msk [vmem:[%s199 + $0x1a8] sm:$0xff] %vm1450, %v1407
      %1505 = vst.msk [vmem:[%s199 + $0x1b0] sm:$0xff] %vm1450, %v1408
      %1506 = vst.msk [vmem:[%s199 + $0x1b8] sm:$0xff] %vm1450, %v1409
      %1507 = vst.msk [vmem:[%s199 + $0x1c0] sm:$0xff] %vm1450, %v1410
      %1508 = vst.msk [vmem:[%s199 + $0x1c8] sm:$0xff] %vm1450, %v1411
      %1509 = vst.msk [vmem:[%s199 + $0x1d0] sm:$0xff] %vm1450, %v1412
      %1510 = vst.msk [vmem:[%s199 + $0x1d8] sm:$0xff] %vm1450, %v1413
      %1511 = vst.msk [vmem:[%s199 + $0x1e0] sm:$0xff] %vm1450, %v1414
      %1512 = vst.msk [vmem:[%s199 + $0x1e8] sm:$0xff] %vm1450, %v1415
      %1513 = vst.msk [vmem:[%s199 + $0x1f0] sm:$0xff] %vm1450, %v1416
      %1514 = vst.msk [vmem:[%s199 + $0x1f8] sm:$0xff] %vm1450, %v1417
      %1515 = vst.msk [vmem:[%s199 + $0x200] sm:$0xff] %vm1450, %v1418
      %1516 = vst.msk [vmem:[%s199 + $0x208] sm:$0xff] %vm1450, %v1419
      %1517 = vst.msk [vmem:[%s199 + $0x210] sm:$0xff] %vm1450, %v1420
      %1518 = vst.msk [vmem:[%s199 + $0x218] sm:$0xff] %vm1450, %v1421
      %1519 = vst.msk [vmem:[%s199 + $0x220] sm:$0xff] %vm1450, %v1422
      %1520 = vst.msk [vmem:[%s199 + $0x228] sm:$0xff] %vm1450, %v1423
      %1521 = vst.msk [vmem:[%s199 + $0x230] sm:$0xff] %vm1450, %v1424
      %1522 = vst.msk [vmem:[%s199 + $0x238] sm:$0xff] %vm1450, %v1425
      %1523 = vst.msk [vmem:[%s199 + $0x240] sm:$0xff] %vm1450, %v1426
      %1524 = vst.msk [vmem:[%s199 + $0x248] sm:$0xff] %vm1450, %v1427
      %1525 = vst.msk [vmem:[%s199 + $0x250] sm:$0xff] %vm1450, %v1428
      %1526 = vst.msk [vmem:[%s199 + $0x258] sm:$0xff] %vm1450, %v1429
      %1527 = vst.msk [vmem:[%s199 + $0x260] sm:$0xff] %vm1450, %v1430
      %1528 = vst.msk [vmem:[%s199 + $0x268] sm:$0xff] %vm1450, %v1431
      %1529 = vst.msk [vmem:[%s199 + $0x270] sm:$0xff] %vm1450, %v1432
      %1530 = vst.msk [vmem:[%s199 + $0x278] sm:$0xff] %vm1450, %v1433
      %1531 = vst.msk [vmem:[%s199 + $0x280] sm:$0xff] %vm1450, %v1434
      %1532 = vst.msk [vmem:[%s199 + $0x288] sm:$0xff] %vm1450, %v1435
      %1533 = vst.msk [vmem:[%s199 + $0x290] sm:$0xff] %vm1450, %v1436
      %1534 = vst.msk [vmem:[%s199 + $0x298] sm:$0xff] %vm1450, %v1437
      %1535 = vst.msk [vmem:[%s199 + $0x2a0] sm:$0xff] %vm1450, %v1438
      %1536 = vst.msk [vmem:[%s199 + $0x2a8] sm:$0xff] %vm1450, %v1439
      %1537 = vst.msk [vmem:[%s199 + $0x2b0] sm:$0xff] %vm1450, %v1440
      %1538 = vst.msk [vmem:[%s199 + $0x2b8] sm:$0xff] %vm1450, %v1441
      %1539 = vst.msk [vmem:[%s199 + $0x2c0] sm:$0xff] %vm1450, %v1442
      %1540 = vst.msk [vmem:[%s199 + $0x2c8] sm:$0xff] %vm1450, %v1443
      %1541 = vst.msk [vmem:[%s199 + $0x2d0] sm:$0xff] %vm1450, %v1444
      %1542 = vst.msk [vmem:[%s199 + $0x2d8] sm:$0xff] %vm1450, %v1445
      %1543 = vst.msk [vmem:[%s199 + $0x2e0] sm:$0xff] %vm1450, %v1446
      %1544 = vst.msk [vmem:[%s199 + $0x2e8] sm:$0xff] %vm1450, %v1447
      %1545 = vst.msk [vmem:[%s199 + $0x2f0] sm:$0xff] %vm1450, %v1448
      %1546 = vst.msk [vmem:[%s199 + $0x2f8] sm:$0xff] %vm1450, %v1449
      %s1547 = smul.u32 96, %s15
      %p1548 = scmp.lt.s32.totalorder %s1547, 191
      %s1549 = scalar_select %p1548, %s1547, 191
      %s1550 = smul.addr %s1549, 8
      %s1551 = scalar_lea.vmem %s4, %s1550
      // Predicated region
      $region37: #{tpu_custom_call.1} parent=35 // pred_check
        %p1552 = pneg %p122
      $region38: #{tpu_custom_call.1} parent=35 // pred_check_branch
        %1554 = sbr.rel (%p1552) target = $region40
      $region39: #{tpu_custom_call.1} parent=35 // pred_region
        %s1555 = smul.u32 96, %s15
      $region40: #{tpu_custom_call.1} parent=35 // pred_fallthru
        _
    $region36: #{tpu_custom_call.1} parent=5 // pred_fallthru
      _
    %p1556 = scmp.le.s32.totalorder 2, %s10
    // Predicated region
    $region41: #{tpu_custom_call.1} parent=5 // pred_check
      %p1557 = pneg %p1556
    $region42: #{tpu_custom_call.1} parent=5 // pred_check_branch
      %1559 = sbr.rel (%p1557) target = $region44
    $region43: #{tpu_custom_call.1} parent=5 // pred_region
      %s1560 = ssub.s32 %s10, 2
      // Predicated region
      $region45: #{tpu_custom_call.1} parent=43 // pred_check
        %p1561 = pneg %p128
      $region46: #{tpu_custom_call.1} parent=43 // pred_check_branch
        %1563 = sbr.rel (%p1561) target = $region48
      $region47: #{tpu_custom_call.1} parent=43 // pred_region
        %s1564 = smul.u32 96, %s16
        %p1565 = scmp.lt.s32.totalorder %s1564, 191
        %s1566 = scalar_select %p1565, %s1564, 191
        %s1567 = smul.addr %s1566, 8
        %s1568 = scalar_lea.vmem %s4, %s1567
      $region48: #{tpu_custom_call.1} parent=43 // pred_fallthru
        _
    $region44: #{tpu_custom_call.1} parent=5 // pred_fallthru
      _
  $region6: #{tpu_custom_call.1} parent=0 // loop_footer
    %s14 = sadd.s32 1, %s10
  $region7: #{tpu_custom_call.1} parent=0 // loop_footer_branch
    %9 = sbr.rel target = $region3
  $region8: #{tpu_custom_call.1} parent=0 // loop_exit
    _

</llo_original>
